<compile_context>
chip_gen: v6e
topology: v6e:2x2x1
jax: 0.10.0
libtpu: 0.0.40
codegen_flags: <defaults>
</compile_context>

<pallas_src>
import functools

import jax
import jax.numpy as jnp
from jax.experimental import pallas as pl
from jax.experimental.pallas import tpu as pltpu

# ---------------------------------------------------------------------------
# Config constants (CONFIG dict of the original repo is not provided; pick
# deterministic synthetic values).
# ---------------------------------------------------------------------------
CONFIG = {
    "ADF_ALPHA": 1.0,
    "ADF_GAMMA": 1.0,
    "ADF_BETA_V": 1.0,
    "GAMMA_DELTA": 1.0,
    "DISPLACEMENT_X": 0.01,
}

NUM_HIDDEN_LAYERS = 6
NEURONS = 30  # neurons_per_layer

# Fused (block-diagonal) layout constants.
FUSED = 64          # fused hidden width: u rows 0:30, v rows 32:62, rest zero
U_OFF = 0
V_OFF = 32
AUX_COLS = 16       # aux slab lane width (only 10 columns used)
COL_WIN0 = 0        # fused input weight, column for x0
COL_WIN1 = 1        # fused input weight, column for x1
COL_BIN = 2         # fused input bias
COL_BHID = 3        # fused hidden biases occupy columns 3 .. 3+L-1
COL_BOUT = COL_BHID + NUM_HIDDEN_LAYERS  # fused output bias (rows 0 / 1)


def _pow(x, p):
    """Trace-time specialized power (CONFIG exponents are Python constants)."""
    p = float(p)
    if p == 1.0:
        return x
    if p == 2.0:
        return x * x
    if p == int(p) and p >= 0.0:
        e = int(p)
        if e == 0:
            return jnp.ones_like(x)
        acc, base = None, x
        while e:
            if e & 1:
                acc = base if acc is None else acc * base
            e >>= 1
            if e:
                base = base * base
        return acc
    return jnp.power(x, p)  # non-integer exponents fall back to log/exp


# ---------------------------------------------------------------------------
# Pallas kernel
# ---------------------------------------------------------------------------
def elasticity_kernel(x_ref, w_ref, aux_ref, o_ref):
    # x_ref  : (2, TM)              f32  — row 0 = x0, row 1 = x1 (feature-major)
    # w_ref  : (L+1, FUSED, FUSED)  f32  — fused block-diagonal weights ("out x in")
    # aux_ref: (FUSED, AUX_COLS)    f32  — fused input weight + all biases
    # o_ref  : (2, TM)              f32  — row 0 = u, row 1 = v
    x0 = x_ref[0:1, :]   # (1, TM)
    x1 = x_ref[1:2, :]   # (1, TM)

    # Input layer (K=2) on the VPU: two outer-product FMAs + bias.
    z = (aux_ref[:, COL_WIN0:COL_WIN0 + 1] * x0
         + aux_ref[:, COL_WIN1:COL_WIN1 + 1] * x1
         + aux_ref[:, COL_BIN:COL_BIN + 1])                     # (FUSED, TM)

    # Fused hidden layers: tanh -> (64,64)@(64,TM) matmul + bias.
    for l in range(NUM_HIDDEN_LAYERS):
        z = jnp.tanh(z)
        z = (jnp.dot(w_ref[l], z, preferred_element_type=jnp.float32)
             + aux_ref[:, COL_BHID + l:COL_BHID + l + 1])

    # Output projections folded into the last fused matmul:
    #   row 0 of the result = w_u, row 1 = w_v (plus their output biases).
    y = (jnp.dot(w_ref[NUM_HIDDEN_LAYERS], z, preferred_element_type=jnp.float32)
         + aux_ref[:, COL_BOUT:COL_BOUT + 1])                   # (FUSED, TM)
    w_u = y[0:1, :]                                             # (1, TM)
    w_v = y[1:2, :]                                             # (1, TM)

    # ADF boundary composition (exponents specialized at trace time).
    phi_u = _pow(x0, CONFIG["ADF_ALPHA"]) * _pow(1.0 - x0, CONFIG["ADF_GAMMA"])
    phi_v = _pow(x1, CONFIG["ADF_BETA_V"])
    g_u = CONFIG["DISPLACEMENT_X"] * _pow(x0, CONFIG["GAMMA_DELTA"])

    # Lane-dense stores (last dim = TM, multiple of 128).  g_v == 0.
    o_ref[0:1, :] = g_u + phi_u * w_u
    o_ref[1:2, :] = phi_v * w_v


# ---------------------------------------------------------------------------
# Wrapper
# ---------------------------------------------------------------------------
@functools.partial(jax.jit, static_argnames=("tm",))
def elasticity_net(x, w_slab, aux, tm=512):
    """x: (N, 2) f32.  w_slab/aux: packed params (see pack_params).  Returns (N, 2)."""
    n = x.shape[0]
    n_pad = pl.cdiv(n, tm) * tm

    xt = x.T                                            # (2, N) feature-major
    if n_pad != n:                                      # arbitrary batch sizes
        xt = jnp.pad(xt, ((0, 0), (0, n_pad - n)))

    out_t = pl.pallas_call(
        elasticity_kernel,
        out_shape=jax.ShapeDtypeStruct((2, n_pad), jnp.float32),
        grid_spec=pltpu.PrefetchScalarGridSpec(
            num_scalar_prefetch=0,
            grid=(n_pad // tm,),
            in_specs=[
                pl.BlockSpec((2, tm), lambda i: (0, i)),
                pl.BlockSpec(w_slab.shape, lambda i: (0, 0, 0)),  # VMEM-resident
                pl.BlockSpec(aux.shape, lambda i: (0, 0)),        # VMEM-resident
            ],
            out_specs=pl.BlockSpec((2, tm), lambda i: (0, i)),
        ),
        compiler_params=pltpu.CompilerParams(
            dimension_semantics=("parallel",),   # batch axis shards across TCs on v7x
        ),
    )(xt, w_slab, aux)

    return out_t[:, :n].T                               # back to PyTorch (N, 2)


# ---------------------------------------------------------------------------
# Deterministic parameter init (mimics PyTorch nn.Linear uniform init) + packing
# ---------------------------------------------------------------------------
def _linear_init(key, fan_in, fan_out):
    kw, kb = jax.random.split(key)
    bound = 1.0 / float(fan_in) ** 0.5
    w = jax.random.uniform(kw, (fan_in, fan_out), jnp.float32, -bound, bound)
    b = jax.random.uniform(kb, (fan_out,), jnp.float32, -bound, bound)
    return w, b


def init_displacement_net(key):
    keys = jax.random.split(key, NUM_HIDDEN_LAYERS + 2)
    w_in, b_in = _linear_init(keys[0], 2, NEURONS)
    ws, bs = [], []
    for l in range(NUM_HIDDEN_LAYERS):
        w, b = _linear_init(keys[1 + l], NEURONS, NEURONS)
        ws.append(w)
        bs.append(b)
    w_out, b_out = _linear_init(keys[-1], NEURONS, 1)
    return dict(
        w_in=w_in, b_in=b_in.reshape(1, NEURONS),
        w_h=jnp.stack(ws), b_h=jnp.stack(bs),              # (L,H,H), (L,H)
        w_out=w_out, b_out=b_out.reshape(1, 1),
    )


def init_params(key):
    ku, kv = jax.random.split(key)
    u = init_displacement_net(ku)
    v = init_displacement_net(kv)
    return {
        "uw_in": u["w_in"], "ub_in": u["b_in"], "uw_h": u["w_h"],
        "ub_h": u["b_h"], "uw_out": u["w_out"], "ub_out": u["b_out"],
        "vw_in": v["w_in"], "vb_in": v["b_in"], "vw_h": v["w_h"],
        "vb_h": v["b_h"], "vw_out": v["w_out"], "vb_out": v["b_out"],
    }


def pack_params(p):
    """Pack the two DisplacementNets into fused block-diagonal slabs.

    w_slab[l] (l < L)      : fused hidden weight, "out x in" layout
    w_slab[L] rows 0 / 1   : u / v output projections (30 -> 1) folded in
    aux cols 0:2 / 2       : fused input weight (per x0/x1) / input bias
    aux cols 3..3+L-1 / 9  : fused hidden biases / fused output bias
    """
    L, H = NUM_HIDDEN_LAYERS, NEURONS
    w_slab = jnp.zeros((L + 1, FUSED, FUSED), jnp.float32)
    for l in range(L):
        w_slab = w_slab.at[l, U_OFF:U_OFF + H, U_OFF:U_OFF + H].set(p["uw_h"][l].T)
        w_slab = w_slab.at[l, V_OFF:V_OFF + H, V_OFF:V_OFF + H].set(p["vw_h"][l].T)
    w_slab = w_slab.at[L, 0, U_OFF:U_OFF + H].set(p["uw_out"][:, 0])
    w_slab = w_slab.at[L, 1, V_OFF:V_OFF + H].set(p["vw_out"][:, 0])

    aux = jnp.zeros((FUSED, AUX_COLS), jnp.float32)
    aux = aux.at[U_OFF:U_OFF + H, COL_WIN0:COL_WIN0 + 2].set(p["uw_in"].T)
    aux = aux.at[V_OFF:V_OFF + H, COL_WIN0:COL_WIN0 + 2].set(p["vw_in"].T)
    aux = aux.at[U_OFF:U_OFF + H, COL_BIN].set(p["ub_in"][0])
    aux = aux.at[V_OFF:V_OFF + H, COL_BIN].set(p["vb_in"][0])
    for l in range(L):
        aux = aux.at[U_OFF:U_OFF + H, COL_BHID + l].set(p["ub_h"][l])
        aux = aux.at[V_OFF:V_OFF + H, COL_BHID + l].set(p["vb_h"][l])
    aux = aux.at[0, COL_BOUT].set(p["ub_out"][0, 0])
    aux = aux.at[1, COL_BOUT].set(p["vb_out"][0, 0])
    return w_slab, aux


# ---------------------------------------------------------------------------
# Pure-JAX reference (mirrors the PyTorch forward exactly)
# ---------------------------------------------------------------------------
def reference_forward(x, p):
    def mlp(x, w_in, b_in, w_h, b_h, w_out, b_out):
        z = x @ w_in + b_in
        for l in range(NUM_HIDDEN_LAYERS):
            z = jnp.tanh(z)
            z = z @ w_h[l] + b_h[l]
        return (z @ w_out + b_out)[:, 0]

    w_u = mlp(x, p["uw_in"], p["ub_in"], p["uw_h"], p["ub_h"], p["uw_out"], p["ub_out"])
    w_v = mlp(x, p["vw_in"], p["vb_in"], p["vw_h"], p["vb_h"], p["vw_out"], p["vb_out"])
    x0, x1 = x[:, 0], x[:, 1]
    phi_u = x0 ** CONFIG["ADF_ALPHA"] * (1 - x0) ** CONFIG["ADF_GAMMA"]
    phi_v = x1 ** CONFIG["ADF_BETA_V"]
    g_u = CONFIG["DISPLACEMENT_X"] * x0 ** CONFIG["GAMMA_DELTA"]
    g_v = jnp.zeros_like(x1)
    u = g_u + phi_u * w_u
    v = g_v + phi_v * w_v
    return jnp.stack([u, v], axis=1)


# ---------------------------------------------------------------------------
if __name__ == "__main__":
    key = jax.random.PRNGKey(0)
    k_param, k_x = jax.random.split(key)

    params = init_params(k_param)
    w_slab, aux = pack_params(params)

    # N deliberately not a multiple of the tile to exercise the padding path;
    # padded batch 1024 / tm 512 -> grid of 2 so both v7x TensorCores get work.
    N = 1000
    x = jax.random.uniform(k_x, (N, 2), jnp.float32, 0.0, 1.0)

    out = elasticity_net(x, w_slab, aux, tm=512)
    out = jax.block_until_ready(out)

    ref = reference_forward(x, params)
    assert out.shape == (N, 2)
    err = float(jnp.max(jnp.abs(out - ref)))
    assert err < 1e-4, f"mismatch vs reference: max abs err {err}"

    print("KERNEL_OK")
</pallas_src>

<mosaic_0001>
module attributes {stable_mosaic.version = 11 : i64} {
  func.func @elasticity_kernel(%arg0: i32, %arg1: memref<2x512xf32, #tpu.memory_space<vmem>>, %arg2: memref<7x64x64xf32, #tpu.memory_space<vmem>>, %arg3: memref<64x16xf32, #tpu.memory_space<vmem>>, %arg4: memref<2x512xf32, #tpu.memory_space<vmem>>) attributes {dimension_semantics = [#tpu.dimension_semantics<parallel>], iteration_bounds = array<i64: 2>, scalar_prefetch = 0 : i64, scratch_operands = 0 : i64, tpu.core_type = #tpu.core_type<tc>, window_params = [{transform_indices = @transform_0, window_bounds = array<i64: 2, 512>}, {pipeline_mode = #tpu.pipeline_mode<synchronous>, transform_indices = @transform_1, window_bounds = array<i64: 7, 64, 64>}, {pipeline_mode = #tpu.pipeline_mode<synchronous>, transform_indices = @transform_2, window_bounds = array<i64: 64, 16>}, {transform_indices = @transform_3, window_bounds = array<i64: 2, 512>}]} {
    %c0 = arith.constant 0 : index
    %c0_0 = arith.constant 0 : index
    %0 = vector.load %arg1[%c0, %c0_0] : memref<2x512xf32, #tpu.memory_space<vmem>>, vector<1x512xf32>
    %c1 = arith.constant 1 : index
    %c0_1 = arith.constant 0 : index
    %1 = vector.load %arg1[%c1, %c0_1] : memref<2x512xf32, #tpu.memory_space<vmem>>, vector<1x512xf32>
    %c0_2 = arith.constant 0 : index
    %c0_3 = arith.constant 0 : index
    %2 = vector.load %arg3[%c0_2, %c0_3] : memref<64x16xf32, #tpu.memory_space<vmem>>, vector<64x1xf32>
    %3 = vector.broadcast %2 : vector<64x1xf32> to vector<64x512xf32>
    %4 = vector.broadcast %0 : vector<1x512xf32> to vector<64x512xf32>
    %5 = arith.mulf %3, %4 : vector<64x512xf32>
    %c0_4 = arith.constant 0 : index
    %c1_5 = arith.constant 1 : index
    %6 = vector.load %arg3[%c0_4, %c1_5] : memref<64x16xf32, #tpu.memory_space<vmem>>, vector<64x1xf32>
    %7 = vector.broadcast %6 : vector<64x1xf32> to vector<64x512xf32>
    %8 = vector.broadcast %1 : vector<1x512xf32> to vector<64x512xf32>
    %9 = arith.mulf %7, %8 : vector<64x512xf32>
    %10 = arith.addf %5, %9 : vector<64x512xf32>
    %c0_6 = arith.constant 0 : index
    %c2 = arith.constant 2 : index
    %11 = vector.load %arg3[%c0_6, %c2] : memref<64x16xf32, #tpu.memory_space<vmem>>, vector<64x1xf32>
    %12 = vector.broadcast %11 : vector<64x1xf32> to vector<64x512xf32>
    %13 = arith.addf %10, %12 : vector<64x512xf32>
    %14 = math.tanh %13 : vector<64x512xf32>
    %c0_7 = arith.constant 0 : index
    %c0_8 = arith.constant 0 : index
    %c0_9 = arith.constant 0 : index
    %15 = vector.load %arg2[%c0_7, %c0_8, %c0_9] : memref<7x64x64xf32, #tpu.memory_space<vmem>>, vector<1x64x64xf32>
    %16 = vector.shape_cast %15 : vector<1x64x64xf32> to vector<64x64xf32>
    %cst = arith.constant dense<0.000000e+00> : vector<64x512xf32>
    %17 = tpu.matmul %16, %14, %cst {dimension_numbers = #tpu.dot_dimension_numbers<[1], [0], [0], [1], [0, 0, 1, 1], [], []>} : vector<64x64xf32>, vector<64x512xf32>, vector<64x512xf32> -> vector<64x512xf32>
    %c0_10 = arith.constant 0 : index
    %c3 = arith.constant 3 : index
    %18 = vector.load %arg3[%c0_10, %c3] : memref<64x16xf32, #tpu.memory_space<vmem>>, vector<64x1xf32>
    %19 = vector.broadcast %18 : vector<64x1xf32> to vector<64x512xf32>
    %20 = arith.addf %17, %19 : vector<64x512xf32>
    %21 = math.tanh %20 : vector<64x512xf32>
    %c1_11 = arith.constant 1 : index
    %c0_12 = arith.constant 0 : index
    %c0_13 = arith.constant 0 : index
    %22 = vector.load %arg2[%c1_11, %c0_12, %c0_13] : memref<7x64x64xf32, #tpu.memory_space<vmem>>, vector<1x64x64xf32>
    %23 = vector.shape_cast %22 : vector<1x64x64xf32> to vector<64x64xf32>
    %cst_14 = arith.constant dense<0.000000e+00> : vector<64x512xf32>
    %24 = tpu.matmul %23, %21, %cst_14 {dimension_numbers = #tpu.dot_dimension_numbers<[1], [0], [0], [1], [0, 0, 1, 1], [], []>} : vector<64x64xf32>, vector<64x512xf32>, vector<64x512xf32> -> vector<64x512xf32>
    %c0_15 = arith.constant 0 : index
    %c4 = arith.constant 4 : index
    %25 = vector.load %arg3[%c0_15, %c4] : memref<64x16xf32, #tpu.memory_space<vmem>>, vector<64x1xf32>
    %26 = vector.broadcast %25 : vector<64x1xf32> to vector<64x512xf32>
    %27 = arith.addf %24, %26 : vector<64x512xf32>
    %28 = math.tanh %27 : vector<64x512xf32>
    %c2_16 = arith.constant 2 : index
    %c0_17 = arith.constant 0 : index
    %c0_18 = arith.constant 0 : index
    %29 = vector.load %arg2[%c2_16, %c0_17, %c0_18] : memref<7x64x64xf32, #tpu.memory_space<vmem>>, vector<1x64x64xf32>
    %30 = vector.shape_cast %29 : vector<1x64x64xf32> to vector<64x64xf32>
    %cst_19 = arith.constant dense<0.000000e+00> : vector<64x512xf32>
    %31 = tpu.matmul %30, %28, %cst_19 {dimension_numbers = #tpu.dot_dimension_numbers<[1], [0], [0], [1], [0, 0, 1, 1], [], []>} : vector<64x64xf32>, vector<64x512xf32>, vector<64x512xf32> -> vector<64x512xf32>
    %c0_20 = arith.constant 0 : index
    %c5 = arith.constant 5 : index
    %32 = vector.load %arg3[%c0_20, %c5] : memref<64x16xf32, #tpu.memory_space<vmem>>, vector<64x1xf32>
    %33 = vector.broadcast %32 : vector<64x1xf32> to vector<64x512xf32>
    %34 = arith.addf %31, %33 : vector<64x512xf32>
    %35 = math.tanh %34 : vector<64x512xf32>
    %c3_21 = arith.constant 3 : index
    %c0_22 = arith.constant 0 : index
    %c0_23 = arith.constant 0 : index
    %36 = vector.load %arg2[%c3_21, %c0_22, %c0_23] : memref<7x64x64xf32, #tpu.memory_space<vmem>>, vector<1x64x64xf32>
    %37 = vector.shape_cast %36 : vector<1x64x64xf32> to vector<64x64xf32>
    %cst_24 = arith.constant dense<0.000000e+00> : vector<64x512xf32>
    %38 = tpu.matmul %37, %35, %cst_24 {dimension_numbers = #tpu.dot_dimension_numbers<[1], [0], [0], [1], [0, 0, 1, 1], [], []>} : vector<64x64xf32>, vector<64x512xf32>, vector<64x512xf32> -> vector<64x512xf32>
    %c0_25 = arith.constant 0 : index
    %c6 = arith.constant 6 : index
    %39 = vector.load %arg3[%c0_25, %c6] : memref<64x16xf32, #tpu.memory_space<vmem>>, vector<64x1xf32>
    %40 = vector.broadcast %39 : vector<64x1xf32> to vector<64x512xf32>
    %41 = arith.addf %38, %40 : vector<64x512xf32>
    %42 = math.tanh %41 : vector<64x512xf32>
    %c4_26 = arith.constant 4 : index
    %c0_27 = arith.constant 0 : index
    %c0_28 = arith.constant 0 : index
    %43 = vector.load %arg2[%c4_26, %c0_27, %c0_28] : memref<7x64x64xf32, #tpu.memory_space<vmem>>, vector<1x64x64xf32>
    %44 = vector.shape_cast %43 : vector<1x64x64xf32> to vector<64x64xf32>
    %cst_29 = arith.constant dense<0.000000e+00> : vector<64x512xf32>
    %45 = tpu.matmul %44, %42, %cst_29 {dimension_numbers = #tpu.dot_dimension_numbers<[1], [0], [0], [1], [0, 0, 1, 1], [], []>} : vector<64x64xf32>, vector<64x512xf32>, vector<64x512xf32> -> vector<64x512xf32>
    %c0_30 = arith.constant 0 : index
    %c7 = arith.constant 7 : index
    %46 = vector.load %arg3[%c0_30, %c7] : memref<64x16xf32, #tpu.memory_space<vmem>>, vector<64x1xf32>
    %47 = vector.broadcast %46 : vector<64x1xf32> to vector<64x512xf32>
    %48 = arith.addf %45, %47 : vector<64x512xf32>
    %49 = math.tanh %48 : vector<64x512xf32>
    %c5_31 = arith.constant 5 : index
    %c0_32 = arith.constant 0 : index
    %c0_33 = arith.constant 0 : index
    %50 = vector.load %arg2[%c5_31, %c0_32, %c0_33] : memref<7x64x64xf32, #tpu.memory_space<vmem>>, vector<1x64x64xf32>
    %51 = vector.shape_cast %50 : vector<1x64x64xf32> to vector<64x64xf32>
    %cst_34 = arith.constant dense<0.000000e+00> : vector<64x512xf32>
    %52 = tpu.matmul %51, %49, %cst_34 {dimension_numbers = #tpu.dot_dimension_numbers<[1], [0], [0], [1], [0, 0, 1, 1], [], []>} : vector<64x64xf32>, vector<64x512xf32>, vector<64x512xf32> -> vector<64x512xf32>
    %c0_35 = arith.constant 0 : index
    %c8 = arith.constant 8 : index
    %53 = vector.load %arg3[%c0_35, %c8] : memref<64x16xf32, #tpu.memory_space<vmem>>, vector<64x1xf32>
    %54 = vector.broadcast %53 : vector<64x1xf32> to vector<64x512xf32>
    %55 = arith.addf %52, %54 : vector<64x512xf32>
    %c6_36 = arith.constant 6 : index
    %c0_37 = arith.constant 0 : index
    %c0_38 = arith.constant 0 : index
    %56 = vector.load %arg2[%c6_36, %c0_37, %c0_38] : memref<7x64x64xf32, #tpu.memory_space<vmem>>, vector<1x64x64xf32>
    %57 = vector.shape_cast %56 : vector<1x64x64xf32> to vector<64x64xf32>
    %cst_39 = arith.constant dense<0.000000e+00> : vector<64x512xf32>
    %58 = tpu.matmul %57, %55, %cst_39 {dimension_numbers = #tpu.dot_dimension_numbers<[1], [0], [0], [1], [0, 0, 1, 1], [], []>} : vector<64x64xf32>, vector<64x512xf32>, vector<64x512xf32> -> vector<64x512xf32>
    %c0_40 = arith.constant 0 : index
    %c9 = arith.constant 9 : index
    %59 = vector.load %arg3[%c0_40, %c9] : memref<64x16xf32, #tpu.memory_space<vmem>>, vector<64x1xf32>
    %60 = vector.broadcast %59 : vector<64x1xf32> to vector<64x512xf32>
    %61 = arith.addf %58, %60 : vector<64x512xf32>
    %62 = vector.extract_strided_slice %61 {offsets = [0, 0], sizes = [1, 512], strides = [1, 1]} : vector<64x512xf32> to vector<1x512xf32>
    %63 = vector.extract_strided_slice %61 {offsets = [1, 0], sizes = [1, 512], strides = [1, 1]} : vector<64x512xf32> to vector<1x512xf32>
    %cst_41 = arith.constant 1.000000e+00 : f32
    %64 = vector.broadcast %cst_41 : f32 to vector<1x512xf32>
    %65 = arith.subf %64, %0 : vector<1x512xf32>
    %66 = arith.mulf %0, %65 : vector<1x512xf32>
    %cst_42 = arith.constant 0.00999999977 : f32
    %67 = vector.broadcast %cst_42 : f32 to vector<1x512xf32>
    %68 = arith.mulf %67, %0 : vector<1x512xf32>
    %69 = arith.mulf %66, %62 : vector<1x512xf32>
    %70 = arith.addf %68, %69 : vector<1x512xf32>
    %c0_43 = arith.constant 0 : index
    %c0_44 = arith.constant 0 : index
    %71 = vector.load %arg4[%c0_43, %c0_44] : memref<2x512xf32, #tpu.memory_space<vmem>>, vector<1x512xf32>
    tpu.vector_store %arg4[%c0_43, %c0_44], %70 {strides = array<i32>} : memref<2x512xf32, #tpu.memory_space<vmem>>, vector<1x512xf32>,
    %72 = arith.mulf %1, %63 : vector<1x512xf32>
    %c1_45 = arith.constant 1 : index
    %c0_46 = arith.constant 0 : index
    %73 = vector.load %arg4[%c1_45, %c0_46] : memref<2x512xf32, #tpu.memory_space<vmem>>, vector<1x512xf32>
    tpu.vector_store %arg4[%c1_45, %c0_46], %72 {strides = array<i32>} : memref<2x512xf32, #tpu.memory_space<vmem>>, vector<1x512xf32>,
    return
  }
  func.func @transform_0(%arg0: i32) -> (i32, i32) {
    %c0_i32 = arith.constant 0 : i32
    %c0_i32_0 = arith.constant 0 : i32
    return %c0_i32, %arg0 : i32, i32
  }
  func.func @transform_1(%arg0: i32) -> (i32, i32, i32) {
    %c0_i32 = arith.constant 0 : i32
    %c0_i32_0 = arith.constant 0 : i32
    %c0_i32_1 = arith.constant 0 : i32
    %c0_i32_2 = arith.constant 0 : i32
    return %c0_i32, %c0_i32_0, %c0_i32_1 : i32, i32, i32
  }
  func.func @transform_2(%arg0: i32) -> (i32, i32) {
    %c0_i32 = arith.constant 0 : i32
    %c0_i32_0 = arith.constant 0 : i32
    %c0_i32_1 = arith.constant 0 : i32
    return %c0_i32, %c0_i32_0 : i32, i32
  }
  func.func @transform_3(%arg0: i32) -> (i32, i32) {
    %c0_i32 = arith.constant 0 : i32
    %c0_i32_0 = arith.constant 0 : i32
    return %c0_i32, %arg0 : i32, i32
  }
}

</mosaic_0001>

<llo_original>
// kernel: elasticity_net.1
$region0: #{elasticity_net.1}
  #allocation0 [shape = 'u32[]', space=smem, size = 0x4, offset = 0x4, fixed_abs, tag = 'smem constant byte address 0x4 - core index']
  #allocation1 [shape = 'u32[144,128]{1,0:T(1,128)}', space=vmem, size = 0x12000, scoped, tag = 'internal scratch']
  %s0 = inlined_call_operand.vmem [shape: f32[2,1024], index: 0, kind: input, shape index: {}]
  %s1 = inlined_call_operand.hbm [shape: f32[7,64,64], index: 1, kind: input, shape index: {}]
  %s2 = inlined_call_operand.vmem [shape: f32[64,16], index: 2, kind: input, shape index: {}]
  %s3 = inlined_call_operand.vmem [shape: f32[2,1024], index: 3, kind: output, shape index: {}]
  %s4 = sld [smem:[#allocation0]]
  $region49: #{elasticity_net.1} parent=0
    _
  %s6 = ssub.s32 1, %s4
  %s7 = scalar_select 0, %s6, %s4
  $region1: #{elasticity_net.1} parent=0
    #allocation2 [shape = 'u8[229376]{0}', space=vmem, size = 0x38000, scoped, tag = 'input window, operand 1, single buffered']
    #allocation3 [shape = 's32[2]{0}', space=sflag, size = 0x8, scoped, tag = 'scoped memory for elasticity_net.1']
    %8 = vsyncpa [#allocation3], 0
    loop: start=0, step=1, limit=4
    $region2: #{elasticity_net.1} parent=1 // loop_pre_header
      _
    $region3: #{elasticity_net.1} parent=1 // loop_header
      %s10 = sphi 0, %s14
      %p11 = scmp.ge.s32.totalorder %s10, 4
      %s20 = sphi 0, %s22
      %s23 = sphi 0, %s20
      %s24 = sphi 0, %s23
      %s40 = sphi 0, %s24
      %s44 = sphi 0, %s44
      %s46 = sphi 0, %s44
      %s47 = sphi 0, %s46
      %s61 = sphi 0, %s47
      %s65 = sphi 0, %s65
      %s67 = sphi 0, %s65
      %s68 = sphi 0, %s67
      %s82 = sphi 0, %s68
      %s88 = sphi 0, %s90
      %s91 = sphi 0, %s88
      %s92 = sphi 0, %s91
      %s108 = sphi 0, %s92
    $region4: #{elasticity_net.1} parent=1 // loop_header_branch
      %13 = sbr.rel (%p11) target = $region8
    $region5: #{elasticity_net.1} parent=1 // loop_body
      %s15 = ssub.s32 %s10, 1
      %s16 = ssub.s32 %s10, 2
      %s17 = sadd.s32 %s10, 1
      %s18 = ssub.s32 %s10, %s17
      %p19 = scmp.eq.s32.totalorder %s18, 0
      %s21 = sadd.s32 %s20, 1
      %s22 = scalar_select %p19, %s20, %s21
      %p25 = pneg %p19
      %p26 = scmp.eq.s32.totalorder %s10, 1
      %p27 = por %p25, %p26
      %p28 = scmp.ne.s32.totalorder %s20, %s23
      %p29 = scmp.eq.s32.totalorder %s10, 0
      %p30 = por %p28, %p29
      %p31 = scmp.ne.s32.totalorder %s20, %s23
      %p32 = scmp.eq.s32.totalorder %s15, 1
      %p33 = por %p31, %p32
      %p34 = scmp.ne.s32.totalorder %s23, %s24
      %p35 = scmp.eq.s32.totalorder %s15, 0
      %p36 = por %p34, %p35
      %p37 = scmp.ne.s32.totalorder %s23, %s24
      %p38 = scmp.eq.s32.totalorder %s16, 1
      %p39 = por %p37, %p38
      %p41 = scmp.ne.s32.totalorder %s24, %s40
      %p42 = scmp.eq.s32.totalorder %s16, 0
      %p43 = por %p41, %p42
      %s45 = sadd.s32 %s44, 1
      %p48 = scmp.eq.s32.totalorder %s10, 1
      %p49 = scmp.ne.s32.totalorder %s44, %s46
      %p50 = scmp.eq.s32.totalorder %s10, 0
      %p51 = por %p49, %p50
      %p52 = scmp.ne.s32.totalorder %s44, %s46
      %p53 = scmp.eq.s32.totalorder %s15, 1
      %p54 = por %p52, %p53
      %p55 = scmp.ne.s32.totalorder %s46, %s47
      %p56 = scmp.eq.s32.totalorder %s15, 0
      %p57 = por %p55, %p56
      %p58 = scmp.ne.s32.totalorder %s46, %s47
      %p59 = scmp.eq.s32.totalorder %s16, 1
      %p60 = por %p58, %p59
      %p62 = scmp.ne.s32.totalorder %s47, %s61
      %p63 = scmp.eq.s32.totalorder %s16, 0
      %p64 = por %p62, %p63
      %s66 = sadd.s32 %s65, 1
      %p69 = scmp.eq.s32.totalorder %s10, 1
      %p70 = scmp.ne.s32.totalorder %s65, %s67
      %p71 = scmp.eq.s32.totalorder %s10, 0
      %p72 = por %p70, %p71
      %p73 = scmp.ne.s32.totalorder %s65, %s67
      %p74 = scmp.eq.s32.totalorder %s15, 1
      %p75 = por %p73, %p74
      %p76 = scmp.ne.s32.totalorder %s67, %s68
      %p77 = scmp.eq.s32.totalorder %s15, 0
      %p78 = por %p76, %p77
      %p79 = scmp.ne.s32.totalorder %s67, %s68
      %p80 = scmp.eq.s32.totalorder %s16, 1
      %p81 = por %p79, %p80
      %p83 = scmp.ne.s32.totalorder %s68, %s82
      %p84 = scmp.eq.s32.totalorder %s16, 0
      %p85 = por %p83, %p84
      %s86 = ssub.s32 %s10, %s17
      %p87 = scmp.eq.s32.totalorder %s86, 0
      %s89 = sadd.s32 %s88, 1
      %s90 = scalar_select %p87, %s88, %s89
      %p93 = pneg %p87
      %p94 = scmp.eq.s32.totalorder %s10, 1
      %p95 = por %p93, %p94
      %p96 = scmp.ne.s32.totalorder %s88, %s91
      %p97 = scmp.eq.s32.totalorder %s10, 0
      %p98 = por %p96, %p97
      %p99 = scmp.ne.s32.totalorder %s88, %s91
      %p100 = scmp.eq.s32.totalorder %s15, 1
      %p101 = por %p99, %p100
      %p102 = scmp.ne.s32.totalorder %s91, %s92
      %p103 = scmp.eq.s32.totalorder %s15, 0
      %p104 = por %p102, %p103
      %p105 = scmp.ne.s32.totalorder %s91, %s92
      %p106 = scmp.eq.s32.totalorder %s16, 1
      %p107 = por %p105, %p106
      %p109 = scmp.ne.s32.totalorder %s92, %s108
      %p110 = scmp.eq.s32.totalorder %s16, 0
      %p111 = por %p109, %p110
      %p112 = scmp.le.s32.totalorder 1, %s10
      %p113 = scmp.lt.s32.totalorder %s10, 3
      %p114 = pnand %p112, %p113
      %p115 = pneg %p114
      // Predicated region
      $region9: #{elasticity_net.1} parent=5 // pred_check
        _
      $region10: #{elasticity_net.1} parent=5 // pred_check_branch
        %117 = sbr.rel (%p114) target = $region12
      $region11: #{elasticity_net.1} parent=5 // pred_region
        %s118 = ssub.s32 %s10, 1
        // Predicated region
        $region13: #{elasticity_net.1} parent=11 // pred_check
          %p119 = pneg %p57
        $region14: #{elasticity_net.1} parent=11 // pred_check_branch
          %121 = sbr.rel (%p119) target = $region16
        $region15: #{elasticity_net.1} parent=11 // pred_region
          %s123 = ssub.s32 7168, 7168
          %124 = vsyncadd [#allocation3], %s123
          %s125 = sshll.u32 [#allocation2], 4
          %s126 = int_to_ptr.vmem [resolvable:$true] %s125
          %131 = dma.hbm_to_vmem [thread:$0]  %s1, 7168, %s126, [#allocation3], 128, 128, 8
        $region16: #{elasticity_net.1} parent=11 // pred_fallthru
          _
        // Predicated region
        $region17: #{elasticity_net.1} parent=11 // pred_check
          %p132 = pneg %p78
        $region18: #{elasticity_net.1} parent=11 // pred_check_branch
          %134 = sbr.rel (%p132) target = $region20
        $region19: #{elasticity_net.1} parent=11 // pred_region
          _
        $region20: #{elasticity_net.1} parent=11 // pred_fallthru
          _
      $region12: #{elasticity_net.1} parent=5 // pred_fallthru
        _
      %p135 = scmp.lt.s32.totalorder %s10, 2
      // Predicated region
      $region21: #{elasticity_net.1} parent=5 // pred_check
        %p136 = pneg %p135
      $region22: #{elasticity_net.1} parent=5 // pred_check_branch
        %138 = sbr.rel (%p136) target = $region24
      $region23: #{elasticity_net.1} parent=5 // pred_region
        // Predicated region
        $region25: #{elasticity_net.1} parent=23 // pred_check
          %p139 = pneg %p30
        $region26: #{elasticity_net.1} parent=23 // pred_check_branch
          %141 = sbr.rel (%p139) target = $region28
        $region27: #{elasticity_net.1} parent=23 // pred_region
          %s142 = smul.u32 4, %s10
          %p143 = scmp.lt.s32.totalorder %s142, 7
          %s144 = scalar_select %p143, %s142, 7
          %s145 = smul.addr %s144, 2
          %s146 = scalar_lea.vmem %s0, %s145
          %s147 = smul.u32 4, %s10
        $region28: #{elasticity_net.1} parent=23 // pred_fallthru
          _
      $region24: #{elasticity_net.1} parent=5 // pred_fallthru
        _
      %p148 = scmp.le.s32.totalorder 1, %s10
      %p149 = scmp.lt.s32.totalorder %s10, 3
      %p150 = pnand %p148, %p149
      %p151 = pneg %p150
      // Predicated region
      $region29: #{elasticity_net.1} parent=5 // pred_check
        _
      $region30: #{elasticity_net.1} parent=5 // pred_check_branch
        %153 = sbr.rel (%p150) target = $region32
      $region31: #{elasticity_net.1} parent=5 // pred_region
        %s154 = ssub.s32 %s10, 1
        // Predicated region
        $region33: #{elasticity_net.1} parent=31 // pred_check
          %p155 = pneg %p57
        $region34: #{elasticity_net.1} parent=31 // pred_check_branch
          %157 = sbr.rel (%p155) target = $region36
        $region35: #{elasticity_net.1} parent=31 // pred_region
          %158 = dma.done [#allocation3], 7168
        $region36: #{elasticity_net.1} parent=31 // pred_fallthru
          _
        %s159 = smul.u32 4, %s15
        %p160 = scmp.lt.s32.totalorder %s159, 7
        %s161 = scalar_select %p160, %s159, 7
        %s162 = smul.addr %s161, 2
        %s163 = scalar_lea.vmem %s0, %s162
        %p164 = pneg %p36
        %p165 = pneg %p33
        %p166 = pneg %p57
        %p167 = pneg %p54
        %p168 = pneg %p78
        %p169 = pneg %p75
        %p170 = pneg %p104
        %p171 = pneg %p101
        %s172 = smul.u32 4, %s15
        %p173 = scmp.lt.s32.totalorder %s172, 7
        %s174 = scalar_select %p173, %s172, 7
        %s175 = smul.addr %s174, 2
        %s176 = scalar_lea.vmem %s3, %s175
        %s177 = smul.u32 4, %s15
        %p178 = scmp.lt.s32.totalorder %s177, 7
        %s179 = scalar_select %p178, %s177, 7
        %s180 = smul.addr %s179, 2
        %s181 = scalar_lea.vmem %s0, %s180
        %s182 = smul.u32 4, %s15
        %s183 = smul.u32 4, %s15
        %p184 = scmp.lt.s32.totalorder %s183, 7
        %s185 = scalar_select %p184, %s183, 7
        %s186 = smul.addr %s185, 2
        %s187 = scalar_lea.vmem %s3, %s186
        %s188 = smul.u32 4, %s15
        %v189 = vld [vmem:[%s181] ss:$2 sm:$0xf]
        %s190 = scalar_lea.vmem %s181, 1
        %v191 = vld [vmem:[%s190] ss:$2 sm:$0xf]
        %v192 = vld [vmem:[%s2] sm:$0xff]
        %v193 = vld [vmem:[%s2 + $0x8] sm:$0xff]
        %v194 = vld [vmem:[%s2 + $0x10] sm:$0xff]
        %v195 = vld [vmem:[%s2 + $0x18] sm:$0xff]
        %v196 = vld [vmem:[%s2 + $0x20] sm:$0xff]
        %v197 = vld [vmem:[%s2 + $0x28] sm:$0xff]
        %v198 = vld [vmem:[%s2 + $0x30] sm:$0xff]
        %v199 = vld [vmem:[%s2 + $0x38] sm:$0xff]
        %201 = vset.pattern.permute.xlu0 0
        %202 = vperm.xlu0 %201, %v192
        %v203 = vpop.permute.xlu0 %202
        %206 = vset.pattern.permute.xlu0 0
        %207 = vperm.xlu0 %206, %v193
        %v208 = vpop.permute.xlu0 %207
        %211 = vset.pattern.permute.xlu0 0
        %212 = vperm.xlu0 %211, %v194
        %v213 = vpop.permute.xlu0 %212
        %216 = vset.pattern.permute.xlu0 0
        %217 = vperm.xlu0 %216, %v195
        %v218 = vpop.permute.xlu0 %217
        %221 = vset.pattern.permute.xlu0 0
        %222 = vperm.xlu0 %221, %v196
        %v223 = vpop.permute.xlu0 %222
        %226 = vset.pattern.permute.xlu0 0
        %227 = vperm.xlu0 %226, %v197
        %v228 = vpop.permute.xlu0 %227
        %231 = vset.pattern.permute.xlu0 0
        %232 = vperm.xlu0 %231, %v198
        %v233 = vpop.permute.xlu0 %232
        %236 = vset.pattern.permute.xlu0 0
        %237 = vperm.xlu0 %236, %v199
        %v238 = vpop.permute.xlu0 %237
        %v241 = vlaneseq
        %v242 = vshrl.u32 %v241, 7
        %v243 = vsub.s32 0, %v242
        %v244 = vrot.slane %v189, %v243
        %v245 = vlaneseq
        %v246 = vshrl.u32 %v245, 7
        %v247 = vsub.s32 1, %v246
        %v248 = vrot.slane %v189, %v247
        %v249 = vlaneseq
        %v250 = vshrl.u32 %v249, 7
        %v251 = vsub.s32 2, %v250
        %v252 = vrot.slane %v189, %v251
        %v253 = vlaneseq
        %v254 = vshrl.u32 %v253, 7
        %v255 = vsub.s32 3, %v254
        %v256 = vrot.slane %v189, %v255
        %v261 = vmul.f32 %v203, %v244
        %v262 = vmul.f32 %v203, %v248
        %v263 = vmul.f32 %v203, %v252
        %v264 = vmul.f32 %v203, %v256
        %v265 = vmul.f32 %v208, %v244
        %v266 = vmul.f32 %v208, %v248
        %v267 = vmul.f32 %v208, %v252
        %v268 = vmul.f32 %v208, %v256
        %v269 = vmul.f32 %v213, %v244
        %v270 = vmul.f32 %v213, %v248
        %v271 = vmul.f32 %v213, %v252
        %v272 = vmul.f32 %v213, %v256
        %v273 = vmul.f32 %v218, %v244
        %v274 = vmul.f32 %v218, %v248
        %v275 = vmul.f32 %v218, %v252
        %v276 = vmul.f32 %v218, %v256
        %v277 = vmul.f32 %v223, %v244
        %v278 = vmul.f32 %v223, %v248
        %v279 = vmul.f32 %v223, %v252
        %v280 = vmul.f32 %v223, %v256
        %v281 = vmul.f32 %v228, %v244
        %v282 = vmul.f32 %v228, %v248
        %v283 = vmul.f32 %v228, %v252
        %v284 = vmul.f32 %v228, %v256
        %v285 = vmul.f32 %v233, %v244
        %v286 = vmul.f32 %v233, %v248
        %v287 = vmul.f32 %v233, %v252
        %v288 = vmul.f32 %v233, %v256
        %v289 = vmul.f32 %v238, %v244
        %v290 = vmul.f32 %v238, %v248
        %v291 = vmul.f32 %v238, %v252
        %v292 = vmul.f32 %v238, %v256
        %293 = vset.pattern.permute.xlu0 1
        %294 = vperm.xlu0 %293, %v192
        %v295 = vpop.permute.xlu0 %294
        %297 = vset.pattern.permute.xlu0 1
        %298 = vperm.xlu0 %297, %v193
        %v299 = vpop.permute.xlu0 %298
        %301 = vset.pattern.permute.xlu0 1
        %302 = vperm.xlu0 %301, %v194
        %v303 = vpop.permute.xlu0 %302
        %305 = vset.pattern.permute.xlu0 1
        %306 = vperm.xlu0 %305, %v195
        %v307 = vpop.permute.xlu0 %306
        %309 = vset.pattern.permute.xlu0 1
        %310 = vperm.xlu0 %309, %v196
        %v311 = vpop.permute.xlu0 %310
        %313 = vset.pattern.permute.xlu0 1
        %314 = vperm.xlu0 %313, %v197
        %v315 = vpop.permute.xlu0 %314
        %317 = vset.pattern.permute.xlu0 1
        %318 = vperm.xlu0 %317, %v198
        %v319 = vpop.permute.xlu0 %318
        %321 = vset.pattern.permute.xlu0 1
        %322 = vperm.xlu0 %321, %v199
        %v323 = vpop.permute.xlu0 %322
        %v326 = vlaneseq
        %v327 = vshrl.u32 %v326, 7
        %v328 = vsub.s32 0, %v327
        %v329 = vrot.slane %v191, %v328
        %v330 = vlaneseq
        %v331 = vshrl.u32 %v330, 7
        %v332 = vsub.s32 1, %v331
        %v333 = vrot.slane %v191, %v332
        %v334 = vlaneseq
        %v335 = vshrl.u32 %v334, 7
        %v336 = vsub.s32 2, %v335
        %v337 = vrot.slane %v191, %v336
        %v338 = vlaneseq
        %v339 = vshrl.u32 %v338, 7
        %v340 = vsub.s32 3, %v339
        %v341 = vrot.slane %v191, %v340
        %v346 = vmul.f32 %v295, %v329
        %v347 = vmul.f32 %v295, %v333
        %v348 = vmul.f32 %v295, %v337
        %v349 = vmul.f32 %v295, %v341
        %v350 = vmul.f32 %v299, %v329
        %v351 = vmul.f32 %v299, %v333
        %v352 = vmul.f32 %v299, %v337
        %v353 = vmul.f32 %v299, %v341
        %v354 = vmul.f32 %v303, %v329
        %v355 = vmul.f32 %v303, %v333
        %v356 = vmul.f32 %v303, %v337
        %v357 = vmul.f32 %v303, %v341
        %v358 = vmul.f32 %v307, %v329
        %v359 = vmul.f32 %v307, %v333
        %v360 = vmul.f32 %v307, %v337
        %v361 = vmul.f32 %v307, %v341
        %v362 = vmul.f32 %v311, %v329
        %v363 = vmul.f32 %v311, %v333
        %v364 = vmul.f32 %v311, %v337
        %v365 = vmul.f32 %v311, %v341
        %v366 = vmul.f32 %v315, %v329
        %v367 = vmul.f32 %v315, %v333
        %v368 = vmul.f32 %v315, %v337
        %v369 = vmul.f32 %v315, %v341
        %v370 = vmul.f32 %v319, %v329
        %v371 = vmul.f32 %v319, %v333
        %v372 = vmul.f32 %v319, %v337
        %v373 = vmul.f32 %v319, %v341
        %v374 = vmul.f32 %v323, %v329
        %v375 = vmul.f32 %v323, %v333
        %v376 = vmul.f32 %v323, %v337
        %v377 = vmul.f32 %v323, %v341
        %v378 = vadd.f32 %v261, %v346
        %v379 = vadd.f32 %v262, %v347
        %v380 = vadd.f32 %v263, %v348
        %v381 = vadd.f32 %v264, %v349
        %v382 = vadd.f32 %v265, %v350
        %v383 = vadd.f32 %v266, %v351
        %v384 = vadd.f32 %v267, %v352
        %v385 = vadd.f32 %v268, %v353
        %v386 = vadd.f32 %v269, %v354
        %v387 = vadd.f32 %v270, %v355
        %v388 = vadd.f32 %v271, %v356
        %v389 = vadd.f32 %v272, %v357
        %v390 = vadd.f32 %v273, %v358
        %v391 = vadd.f32 %v274, %v359
        %v392 = vadd.f32 %v275, %v360
        %v393 = vadd.f32 %v276, %v361
        %v394 = vadd.f32 %v277, %v362
        %v395 = vadd.f32 %v278, %v363
        %v396 = vadd.f32 %v279, %v364
        %v397 = vadd.f32 %v280, %v365
        %v398 = vadd.f32 %v281, %v366
        %v399 = vadd.f32 %v282, %v367
        %v400 = vadd.f32 %v283, %v368
        %v401 = vadd.f32 %v284, %v369
        %v402 = vadd.f32 %v285, %v370
        %v403 = vadd.f32 %v286, %v371
        %v404 = vadd.f32 %v287, %v372
        %v405 = vadd.f32 %v288, %v373
        %v406 = vadd.f32 %v289, %v374
        %v407 = vadd.f32 %v290, %v375
        %v408 = vadd.f32 %v291, %v376
        %v409 = vadd.f32 %v292, %v377
        %410 = vset.pattern.permute.xlu0 2
        %411 = vperm.xlu0 %410, %v192
        %v412 = vpop.permute.xlu0 %411
        %414 = vset.pattern.permute.xlu0 2
        %415 = vperm.xlu0 %414, %v193
        %v416 = vpop.permute.xlu0 %415
        %418 = vset.pattern.permute.xlu0 2
        %419 = vperm.xlu0 %418, %v194
        %v420 = vpop.permute.xlu0 %419
        %422 = vset.pattern.permute.xlu0 2
        %423 = vperm.xlu0 %422, %v195
        %v424 = vpop.permute.xlu0 %423
        %426 = vset.pattern.permute.xlu0 2
        %427 = vperm.xlu0 %426, %v196
        %v428 = vpop.permute.xlu0 %427
        %430 = vset.pattern.permute.xlu0 2
        %431 = vperm.xlu0 %430, %v197
        %v432 = vpop.permute.xlu0 %431
        %434 = vset.pattern.permute.xlu0 2
        %435 = vperm.xlu0 %434, %v198
        %v436 = vpop.permute.xlu0 %435
        %438 = vset.pattern.permute.xlu0 2
        %439 = vperm.xlu0 %438, %v199
        %v440 = vpop.permute.xlu0 %439
        %v442 = vadd.f32 %v378, %v412
        %v443 = vadd.f32 %v379, %v412
        %v444 = vadd.f32 %v380, %v412
        %v445 = vadd.f32 %v381, %v412
        %v446 = vadd.f32 %v382, %v416
        %v447 = vadd.f32 %v383, %v416
        %v448 = vadd.f32 %v384, %v416
        %v449 = vadd.f32 %v385, %v416
        %v450 = vadd.f32 %v386, %v420
        %v451 = vadd.f32 %v387, %v420
        %v452 = vadd.f32 %v388, %v420
        %v453 = vadd.f32 %v389, %v420
        %v454 = vadd.f32 %v390, %v424
        %v455 = vadd.f32 %v391, %v424
        %v456 = vadd.f32 %v392, %v424
        %v457 = vadd.f32 %v393, %v424
        %v458 = vadd.f32 %v394, %v428
        %v459 = vadd.f32 %v395, %v428
        %v460 = vadd.f32 %v396, %v428
        %v461 = vadd.f32 %v397, %v428
        %v462 = vadd.f32 %v398, %v432
        %v463 = vadd.f32 %v399, %v432
        %v464 = vadd.f32 %v400, %v432
        %v465 = vadd.f32 %v401, %v432
        %v466 = vadd.f32 %v402, %v436
        %v467 = vadd.f32 %v403, %v436
        %v468 = vadd.f32 %v404, %v436
        %v469 = vadd.f32 %v405, %v436
        %v470 = vadd.f32 %v406, %v440
        %v471 = vadd.f32 %v407, %v440
        %v472 = vadd.f32 %v408, %v440
        %v473 = vadd.f32 %v409, %v440
        %v474 = vtanh.pop %v442
        %v475 = vtanh.pop %v443
        %v476 = vtanh.pop %v444
        %v477 = vtanh.pop %v445
        %v478 = vtanh.pop %v446
        %v479 = vtanh.pop %v447
        %v480 = vtanh.pop %v448
        %v481 = vtanh.pop %v449
        %v482 = vtanh.pop %v450
        %v483 = vtanh.pop %v451
        %v484 = vtanh.pop %v452
        %v485 = vtanh.pop %v453
        %v486 = vtanh.pop %v454
        %v487 = vtanh.pop %v455
        %v488 = vtanh.pop %v456
        %v489 = vtanh.pop %v457
        %v490 = vtanh.pop %v458
        %v491 = vtanh.pop %v459
        %v492 = vtanh.pop %v460
        %v493 = vtanh.pop %v461
        %v494 = vtanh.pop %v462
        %v495 = vtanh.pop %v463
        %v496 = vtanh.pop %v464
        %v497 = vtanh.pop %v465
        %v498 = vtanh.pop %v466
        %v499 = vtanh.pop %v467
        %v500 = vtanh.pop %v468
        %v501 = vtanh.pop %v469
        %v502 = vtanh.pop %v470
        %v503 = vtanh.pop %v471
        %v504 = vtanh.pop %v472
        %v505 = vtanh.pop %v473
        %v506 = vld [vmem:[#allocation2] sm:$0xff]
        %v507 = vld [vmem:[#allocation2 + $0x8] sm:$0xff]
        %v508 = vld [vmem:[#allocation2 + $0x10] sm:$0xff]
        %v509 = vld [vmem:[#allocation2 + $0x18] sm:$0xff]
        %v510 = vld [vmem:[#allocation2 + $0x20] sm:$0xff]
        %v511 = vld [vmem:[#allocation2 + $0x28] sm:$0xff]
        %v512 = vld [vmem:[#allocation2 + $0x30] sm:$0xff]
        %v513 = vld [vmem:[#allocation2 + $0x38] sm:$0xff]
        %514 = vset.pattern.permute.xlu0 3
        %515 = vperm.xlu0 %514, %v192
        %v516 = vpop.permute.xlu0 %515
        %518 = vset.pattern.permute.xlu0 3
        %519 = vperm.xlu0 %518, %v193
        %v520 = vpop.permute.xlu0 %519
        %522 = vset.pattern.permute.xlu0 3
        %523 = vperm.xlu0 %522, %v194
        %v524 = vpop.permute.xlu0 %523
        %526 = vset.pattern.permute.xlu0 3
        %527 = vperm.xlu0 %526, %v195
        %v528 = vpop.permute.xlu0 %527
        %530 = vset.pattern.permute.xlu0 3
        %531 = vperm.xlu0 %530, %v196
        %v532 = vpop.permute.xlu0 %531
        %534 = vset.pattern.permute.xlu0 3
        %535 = vperm.xlu0 %534, %v197
        %v536 = vpop.permute.xlu0 %535
        %538 = vset.pattern.permute.xlu0 3
        %539 = vperm.xlu0 %538, %v198
        %v540 = vpop.permute.xlu0 %539
        %542 = vset.pattern.permute.xlu0 3
        %543 = vperm.xlu0 %542, %v199
        %v544 = vpop.permute.xlu0 %543
        %vm546 = vcmask 523264
        %v548 = vsel %vm546, %v506, 0
        %v551 = vsel %vm546, %v507, 0
        %v554 = vsel %vm546, %v508, 0
        %v557 = vsel %vm546, %v509, 0
        %v560 = vsel %vm546, %v510, 0
        %v563 = vsel %vm546, %v511, 0
        %v566 = vsel %vm546, %v512, 0
        %v569 = vsel %vm546, %v513, 0
        %571 = vmatprep.subr.mxu0 0.0
        %572 = vmatpush1.msra.mxu0 0.0
        %573 = vmatprep.subr.mxu0 0.0
        %574 = vmatpush1.msra.mxu0 0.0
        %575 = vmatprep.subr.mxu0 0.0
        %576 = vmatpush1.msra.mxu0 0.0
        %577 = vmatprep.subr.mxu0 0.0
        %578 = vmatpush1.msra.mxu0 0.0
        %579 = vmatprep.subr.mxu0 0.0
        %580 = vmatpush1.msra.mxu0 0.0
        %581 = vmatprep.subr.mxu0 0.0
        %582 = vmatpush1.msra.mxu0 0.0
        %583 = vmatprep.subr.mxu0 0.0
        %584 = vmatpush1.msra.mxu0 0.0
        %585 = vmatprep.subr.mxu0 0.0
        %586 = vmatpush1.msra.mxu0 0.0
        %587 = vmatprep.subr.mxu0 %v503
        %588 = vmatpush1.msra.mxu0 %v502
        %589 = vmatprep.subr.mxu0 %v499
        %590 = vmatpush1.msra.mxu0 %v498
        %591 = vmatprep.subr.mxu0 %v495
        %592 = vmatpush1.msra.mxu0 %v494
        %593 = vmatprep.subr.mxu0 %v491
        %594 = vmatpush1.msra.mxu0 %v490
        %595 = vmatprep.subr.mxu0 %v487
        %596 = vmatpush1.msra.mxu0 %v486
        %597 = vmatprep.subr.mxu0 %v483
        %598 = vmatpush1.msra.mxu0 %v482
        %599 = vmatprep.subr.mxu0 %v479
        %600 = vmatpush1.msra.mxu0 %v478
        %601 = vmatprep.subr.mxu0 %v475
        %602 = vmatpush1.msra.mxu0 %v474
        %603 = vmatprep.subr.mxu0 0.0
        %604 = vmatpush2.msra.mxu0 0.0
        %605 = vmatprep.subr.mxu0 0.0
        %606 = vmatpush2.msra.mxu0 0.0
        %607 = vmatprep.subr.mxu0 0.0
        %608 = vmatpush2.msra.mxu0 0.0
        %609 = vmatprep.subr.mxu0 0.0
        %610 = vmatpush2.msra.mxu0 0.0
        %611 = vmatprep.subr.mxu0 0.0
        %612 = vmatpush2.msra.mxu0 0.0
        %613 = vmatprep.subr.mxu0 0.0
        %614 = vmatpush2.msra.mxu0 0.0
        %615 = vmatprep.subr.mxu0 0.0
        %616 = vmatpush2.msra.mxu0 0.0
        %617 = vmatprep.subr.mxu0 0.0
        %618 = vmatpush2.msra.mxu0 0.0
        %619 = vmatprep.subr.mxu0 0.0
        %620 = vmatpush2.msra.mxu0 0.0
        %621 = vmatprep.subr.mxu0 0.0
        %622 = vmatpush2.msra.mxu0 0.0
        %623 = vmatprep.subr.mxu0 0.0
        %624 = vmatpush2.msra.mxu0 0.0
        %625 = vmatprep.subr.mxu0 0.0
        %626 = vmatpush2.msra.mxu0 0.0
        %627 = vmatprep.subr.mxu0 0.0
        %628 = vmatpush2.msra.mxu0 0.0
        %629 = vmatprep.subr.mxu0 0.0
        %630 = vmatpush2.msra.mxu0 0.0
        %631 = vmatprep.subr.mxu0 0.0
        %632 = vmatpush2.msra.mxu0 0.0
        %633 = vmatprep.subr.mxu0 0.0
        %634 = vmatpush2.msra.mxu0 0.0
        %635 = vmatprep.mubr.f32.mxu0 0.0
        %636 = vmatmul.mubr.f32.gmra.mxu0 %v548
        %v637 = vpop.f32.mrf.mxu0
        %v638 = vadd.f32 %v516, %v637
        %v639 = vpop.f32.mrf.mxu0
        %v640 = vadd.f32 %v516, %v639
        %641 = vmatprep.mubr.f32.mxu0 0.0
        %642 = vmatmul.mubr.f32.gmra.mxu0 %v551
        %v643 = vpop.f32.mrf.mxu0
        %v644 = vadd.f32 %v520, %v643
        %v645 = vpop.f32.mrf.mxu0
        %v646 = vadd.f32 %v520, %v645
        %647 = vmatprep.mubr.f32.mxu0 0.0
        %648 = vmatmul.mubr.f32.gmra.mxu0 %v554
        %v649 = vpop.f32.mrf.mxu0
        %v650 = vadd.f32 %v524, %v649
        %v651 = vpop.f32.mrf.mxu0
        %v652 = vadd.f32 %v524, %v651
        %653 = vmatprep.mubr.f32.mxu0 0.0
        %654 = vmatmul.mubr.f32.gmra.mxu0 %v557
        %v655 = vpop.f32.mrf.mxu0
        %v656 = vadd.f32 %v528, %v655
        %v657 = vpop.f32.mrf.mxu0
        %v658 = vadd.f32 %v528, %v657
        %659 = vmatprep.mubr.f32.mxu0 0.0
        %660 = vmatmul.mubr.f32.gmra.mxu0 %v560
        %v661 = vpop.f32.mrf.mxu0
        %v662 = vadd.f32 %v532, %v661
        %v663 = vpop.f32.mrf.mxu0
        %v664 = vadd.f32 %v532, %v663
        %665 = vmatprep.mubr.f32.mxu0 0.0
        %666 = vmatmul.mubr.f32.gmra.mxu0 %v563
        %v667 = vpop.f32.mrf.mxu0
        %v668 = vadd.f32 %v536, %v667
        %v669 = vpop.f32.mrf.mxu0
        %v670 = vadd.f32 %v536, %v669
        %671 = vmatprep.mubr.f32.mxu0 0.0
        %672 = vmatmul.mubr.f32.gmra.mxu0 %v566
        %v673 = vpop.f32.mrf.mxu0
        %v674 = vadd.f32 %v540, %v673
        %v675 = vpop.f32.mrf.mxu0
        %v676 = vadd.f32 %v540, %v675
        %677 = vmatprep.mubr.f32.mxu0 0.0
        %678 = vmatmul.mubr.f32.gmra.mxu0 %v569
        %v679 = vpop.f32.mrf.mxu0
        %v680 = vadd.f32 %v544, %v679
        %v681 = vpop.f32.mrf.mxu0
        %v682 = vadd.f32 %v544, %v681
        %683 = vdwg.mxu0
        %684 = vmatprep.subr.mxu0 0.0
        %685 = vmatpush1.msra.mxu0 0.0
        %686 = vmatprep.subr.mxu0 0.0
        %687 = vmatpush1.msra.mxu0 0.0
        %688 = vmatprep.subr.mxu0 0.0
        %689 = vmatpush1.msra.mxu0 0.0
        %690 = vmatprep.subr.mxu0 0.0
        %691 = vmatpush1.msra.mxu0 0.0
        %692 = vmatprep.subr.mxu0 0.0
        %693 = vmatpush1.msra.mxu0 0.0
        %694 = vmatprep.subr.mxu0 0.0
        %695 = vmatpush1.msra.mxu0 0.0
        %696 = vmatprep.subr.mxu0 0.0
        %697 = vmatpush1.msra.mxu0 0.0
        %698 = vmatprep.subr.mxu0 0.0
        %699 = vmatpush1.msra.mxu0 0.0
        %700 = vmatprep.subr.mxu0 %v505
        %701 = vmatpush1.msra.mxu0 %v504
        %702 = vmatprep.subr.mxu0 %v501
        %703 = vmatpush1.msra.mxu0 %v500
        %704 = vmatprep.subr.mxu0 %v497
        %705 = vmatpush1.msra.mxu0 %v496
        %706 = vmatprep.subr.mxu0 %v493
        %707 = vmatpush1.msra.mxu0 %v492
        %708 = vmatprep.subr.mxu0 %v489
        %709 = vmatpush1.msra.mxu0 %v488
        %710 = vmatprep.subr.mxu0 %v485
        %711 = vmatpush1.msra.mxu0 %v484
        %712 = vmatprep.subr.mxu0 %v481
        %713 = vmatpush1.msra.mxu0 %v480
        %714 = vmatprep.subr.mxu0 %v477
        %715 = vmatpush1.msra.mxu0 %v476
        %716 = vmatprep.subr.mxu0 0.0
        %717 = vmatpush2.msra.mxu0 0.0
        %718 = vmatprep.subr.mxu0 0.0
        %719 = vmatpush2.msra.mxu0 0.0
        %720 = vmatprep.subr.mxu0 0.0
        %721 = vmatpush2.msra.mxu0 0.0
        %722 = vmatprep.subr.mxu0 0.0
        %723 = vmatpush2.msra.mxu0 0.0
        %724 = vmatprep.subr.mxu0 0.0
        %725 = vmatpush2.msra.mxu0 0.0
        %726 = vmatprep.subr.mxu0 0.0
        %727 = vmatpush2.msra.mxu0 0.0
        %728 = vmatprep.subr.mxu0 0.0
        %729 = vmatpush2.msra.mxu0 0.0
        %730 = vmatprep.subr.mxu0 0.0
        %731 = vmatpush2.msra.mxu0 0.0
        %732 = vmatprep.subr.mxu0 0.0
        %733 = vmatpush2.msra.mxu0 0.0
        %734 = vmatprep.subr.mxu0 0.0
        %735 = vmatpush2.msra.mxu0 0.0
        %736 = vmatprep.subr.mxu0 0.0
        %737 = vmatpush2.msra.mxu0 0.0
        %738 = vmatprep.subr.mxu0 0.0
        %739 = vmatpush2.msra.mxu0 0.0
        %740 = vmatprep.subr.mxu0 0.0
        %741 = vmatpush2.msra.mxu0 0.0
        %742 = vmatprep.subr.mxu0 0.0
        %743 = vmatpush2.msra.mxu0 0.0
        %744 = vmatprep.subr.mxu0 0.0
        %745 = vmatpush2.msra.mxu0 0.0
        %746 = vmatprep.subr.mxu0 0.0
        %747 = vmatpush2.msra.mxu0 0.0
        %748 = vmatprep.mubr.f32.mxu0 0.0
        %749 = vmatmul.mubr.f32.gmra.mxu0 %v548
        %v750 = vpop.f32.mrf.mxu0
        %v751 = vadd.f32 %v516, %v750
        %v752 = vpop.f32.mrf.mxu0
        %v753 = vadd.f32 %v516, %v752
        %754 = vmatprep.mubr.f32.mxu0 0.0
        %755 = vmatmul.mubr.f32.gmra.mxu0 %v551
        %v756 = vpop.f32.mrf.mxu0
        %v757 = vadd.f32 %v520, %v756
        %v758 = vpop.f32.mrf.mxu0
        %v759 = vadd.f32 %v520, %v758
        %760 = vmatprep.mubr.f32.mxu0 0.0
        %761 = vmatmul.mubr.f32.gmra.mxu0 %v554
        %v762 = vpop.f32.mrf.mxu0
        %v763 = vadd.f32 %v524, %v762
        %v764 = vpop.f32.mrf.mxu0
        %v765 = vadd.f32 %v524, %v764
        %766 = vmatprep.mubr.f32.mxu0 0.0
        %767 = vmatmul.mubr.f32.gmra.mxu0 %v557
        %v768 = vpop.f32.mrf.mxu0
        %v769 = vadd.f32 %v528, %v768
        %v770 = vpop.f32.mrf.mxu0
        %v771 = vadd.f32 %v528, %v770
        %772 = vmatprep.mubr.f32.mxu0 0.0
        %773 = vmatmul.mubr.f32.gmra.mxu0 %v560
        %v774 = vpop.f32.mrf.mxu0
        %v775 = vadd.f32 %v532, %v774
        %v776 = vpop.f32.mrf.mxu0
        %v777 = vadd.f32 %v532, %v776
        %778 = vmatprep.mubr.f32.mxu0 0.0
        %779 = vmatmul.mubr.f32.gmra.mxu0 %v563
        %v780 = vpop.f32.mrf.mxu0
        %v781 = vadd.f32 %v536, %v780
        %v782 = vpop.f32.mrf.mxu0
        %v783 = vadd.f32 %v536, %v782
        %784 = vmatprep.mubr.f32.mxu0 0.0
        %785 = vmatmul.mubr.f32.gmra.mxu0 %v566
        %v786 = vpop.f32.mrf.mxu0
        %v787 = vadd.f32 %v540, %v786
        %v788 = vpop.f32.mrf.mxu0
        %v789 = vadd.f32 %v540, %v788
        %790 = vmatprep.mubr.f32.mxu0 0.0
        %791 = vmatmul.mubr.f32.gmra.mxu0 %v569
        %v792 = vpop.f32.mrf.mxu0
        %v793 = vadd.f32 %v544, %v792
        %v794 = vpop.f32.mrf.mxu0
        %v795 = vadd.f32 %v544, %v794
        %796 = vdwg.mxu0
        %v797 = vtanh.pop %v638
        %v798 = vtanh.pop %v640
        %v799 = vtanh.pop %v751
        %v800 = vtanh.pop %v753
        %v801 = vtanh.pop %v644
        %v802 = vtanh.pop %v646
        %v803 = vtanh.pop %v757
        %v804 = vtanh.pop %v759
        %v805 = vtanh.pop %v650
        %v806 = vtanh.pop %v652
        %v807 = vtanh.pop %v763
        %v808 = vtanh.pop %v765
        %v809 = vtanh.pop %v656
        %v810 = vtanh.pop %v658
        %v811 = vtanh.pop %v769
        %v812 = vtanh.pop %v771
        %v813 = vtanh.pop %v662
        %v814 = vtanh.pop %v664
        %v815 = vtanh.pop %v775
        %v816 = vtanh.pop %v777
        %v817 = vtanh.pop %v668
        %v818 = vtanh.pop %v670
        %v819 = vtanh.pop %v781
        %v820 = vtanh.pop %v783
        %v821 = vtanh.pop %v674
        %v822 = vtanh.pop %v676
        %v823 = vtanh.pop %v787
        %v824 = vtanh.pop %v789
        %v825 = vtanh.pop %v680
        %v826 = vtanh.pop %v682
        %v827 = vtanh.pop %v793
        %v828 = vtanh.pop %v795
        %s829 = scalar_lea.vmem [#allocation2], 64
        %v830 = vld [vmem:[%s829] sm:$0xff]
        %v831 = vld [vmem:[%s829 + $0x8] sm:$0xff]
        %v832 = vld [vmem:[%s829 + $0x10] sm:$0xff]
        %v833 = vld [vmem:[%s829 + $0x18] sm:$0xff]
        %v834 = vld [vmem:[%s829 + $0x20] sm:$0xff]
        %v835 = vld [vmem:[%s829 + $0x28] sm:$0xff]
        %v836 = vld [vmem:[%s829 + $0x30] sm:$0xff]
        %v837 = vld [vmem:[%s829 + $0x38] sm:$0xff]
        %838 = vset.pattern.permute.xlu0 4
        %839 = vperm.xlu0 %838, %v192
        %v840 = vpop.permute.xlu0 %839
        %842 = vset.pattern.permute.xlu0 4
        %843 = vperm.xlu0 %842, %v193
        %v844 = vpop.permute.xlu0 %843
        %846 = vset.pattern.permute.xlu0 4
        %847 = vperm.xlu0 %846, %v194
        %v848 = vpop.permute.xlu0 %847
        %850 = vset.pattern.permute.xlu0 4
        %851 = vperm.xlu0 %850, %v195
        %v852 = vpop.permute.xlu0 %851
        %854 = vset.pattern.permute.xlu0 4
        %855 = vperm.xlu0 %854, %v196
        %v856 = vpop.permute.xlu0 %855
        %858 = vset.pattern.permute.xlu0 4
        %859 = vperm.xlu0 %858, %v197
        %v860 = vpop.permute.xlu0 %859
        %862 = vset.pattern.permute.xlu0 4
        %863 = vperm.xlu0 %862, %v198
        %v864 = vpop.permute.xlu0 %863
        %866 = vset.pattern.permute.xlu0 4
        %867 = vperm.xlu0 %866, %v199
        %v868 = vpop.permute.xlu0 %867
        %v871 = vsel %vm546, %v830, 0
        %v874 = vsel %vm546, %v831, 0
        %v877 = vsel %vm546, %v832, 0
        %v880 = vsel %vm546, %v833, 0
        %v883 = vsel %vm546, %v834, 0
        %v886 = vsel %vm546, %v835, 0
        %v889 = vsel %vm546, %v836, 0
        %v892 = vsel %vm546, %v837, 0
        %894 = vmatprep.subr.mxu0 0.0
        %895 = vmatpush1.msra.mxu0 0.0
        %896 = vmatprep.subr.mxu0 0.0
        %897 = vmatpush1.msra.mxu0 0.0
        %898 = vmatprep.subr.mxu0 0.0
        %899 = vmatpush1.msra.mxu0 0.0
        %900 = vmatprep.subr.mxu0 0.0
        %901 = vmatpush1.msra.mxu0 0.0
        %902 = vmatprep.subr.mxu0 0.0
        %903 = vmatpush1.msra.mxu0 0.0
        %904 = vmatprep.subr.mxu0 0.0
        %905 = vmatpush1.msra.mxu0 0.0
        %906 = vmatprep.subr.mxu0 0.0
        %907 = vmatpush1.msra.mxu0 0.0
        %908 = vmatprep.subr.mxu0 0.0
        %909 = vmatpush1.msra.mxu0 0.0
        %910 = vmatprep.subr.mxu0 %v826
        %911 = vmatpush1.msra.mxu0 %v825
        %912 = vmatprep.subr.mxu0 %v822
        %913 = vmatpush1.msra.mxu0 %v821
        %914 = vmatprep.subr.mxu0 %v818
        %915 = vmatpush1.msra.mxu0 %v817
        %916 = vmatprep.subr.mxu0 %v814
        %917 = vmatpush1.msra.mxu0 %v813
        %918 = vmatprep.subr.mxu0 %v810
        %919 = vmatpush1.msra.mxu0 %v809
        %920 = vmatprep.subr.mxu0 %v806
        %921 = vmatpush1.msra.mxu0 %v805
        %922 = vmatprep.subr.mxu0 %v802
        %923 = vmatpush1.msra.mxu0 %v801
        %924 = vmatprep.subr.mxu0 %v798
        %925 = vmatpush1.msra.mxu0 %v797
        %926 = vmatprep.subr.mxu0 0.0
        %927 = vmatpush2.msra.mxu0 0.0
        %928 = vmatprep.subr.mxu0 0.0
        %929 = vmatpush2.msra.mxu0 0.0
        %930 = vmatprep.subr.mxu0 0.0
        %931 = vmatpush2.msra.mxu0 0.0
        %932 = vmatprep.subr.mxu0 0.0
        %933 = vmatpush2.msra.mxu0 0.0
        %934 = vmatprep.subr.mxu0 0.0
        %935 = vmatpush2.msra.mxu0 0.0
        %936 = vmatprep.subr.mxu0 0.0
        %937 = vmatpush2.msra.mxu0 0.0
        %938 = vmatprep.subr.mxu0 0.0
        %939 = vmatpush2.msra.mxu0 0.0
        %940 = vmatprep.subr.mxu0 0.0
        %941 = vmatpush2.msra.mxu0 0.0
        %942 = vmatprep.subr.mxu0 0.0
        %943 = vmatpush2.msra.mxu0 0.0
        %944 = vmatprep.subr.mxu0 0.0
        %945 = vmatpush2.msra.mxu0 0.0
        %946 = vmatprep.subr.mxu0 0.0
        %947 = vmatpush2.msra.mxu0 0.0
        %948 = vmatprep.subr.mxu0 0.0
        %949 = vmatpush2.msra.mxu0 0.0
        %950 = vmatprep.subr.mxu0 0.0
        %951 = vmatpush2.msra.mxu0 0.0
        %952 = vmatprep.subr.mxu0 0.0
        %953 = vmatpush2.msra.mxu0 0.0
        %954 = vmatprep.subr.mxu0 0.0
        %955 = vmatpush2.msra.mxu0 0.0
        %956 = vmatprep.subr.mxu0 0.0
        %957 = vmatpush2.msra.mxu0 0.0
        %958 = vmatprep.mubr.f32.mxu0 0.0
        %959 = vmatmul.mubr.f32.gmra.mxu0 %v871
        %v960 = vpop.f32.mrf.mxu0
        %v961 = vadd.f32 %v840, %v960
        %v962 = vpop.f32.mrf.mxu0
        %v963 = vadd.f32 %v840, %v962
        %964 = vmatprep.mubr.f32.mxu0 0.0
        %965 = vmatmul.mubr.f32.gmra.mxu0 %v874
        %v966 = vpop.f32.mrf.mxu0
        %v967 = vadd.f32 %v844, %v966
        %v968 = vpop.f32.mrf.mxu0
        %v969 = vadd.f32 %v844, %v968
        %970 = vmatprep.mubr.f32.mxu0 0.0
        %971 = vmatmul.mubr.f32.gmra.mxu0 %v877
        %v972 = vpop.f32.mrf.mxu0
        %v973 = vadd.f32 %v848, %v972
        %v974 = vpop.f32.mrf.mxu0
        %v975 = vadd.f32 %v848, %v974
        %976 = vmatprep.mubr.f32.mxu0 0.0
        %977 = vmatmul.mubr.f32.gmra.mxu0 %v880
        %v978 = vpop.f32.mrf.mxu0
        %v979 = vadd.f32 %v852, %v978
        %v980 = vpop.f32.mrf.mxu0
        %v981 = vadd.f32 %v852, %v980
        %982 = vmatprep.mubr.f32.mxu0 0.0
        %983 = vmatmul.mubr.f32.gmra.mxu0 %v883
        %v984 = vpop.f32.mrf.mxu0
        %v985 = vadd.f32 %v856, %v984
        %v986 = vpop.f32.mrf.mxu0
        %v987 = vadd.f32 %v856, %v986
        %988 = vmatprep.mubr.f32.mxu0 0.0
        %989 = vmatmul.mubr.f32.gmra.mxu0 %v886
        %v990 = vpop.f32.mrf.mxu0
        %v991 = vadd.f32 %v860, %v990
        %v992 = vpop.f32.mrf.mxu0
        %v993 = vadd.f32 %v860, %v992
        %994 = vmatprep.mubr.f32.mxu0 0.0
        %995 = vmatmul.mubr.f32.gmra.mxu0 %v889
        %v996 = vpop.f32.mrf.mxu0
        %v997 = vadd.f32 %v864, %v996
        %v998 = vpop.f32.mrf.mxu0
        %v999 = vadd.f32 %v864, %v998
        %1000 = vmatprep.mubr.f32.mxu0 0.0
        %1001 = vmatmul.mubr.f32.gmra.mxu0 %v892
        %v1002 = vpop.f32.mrf.mxu0
        %v1003 = vadd.f32 %v868, %v1002
        %v1004 = vpop.f32.mrf.mxu0
        %v1005 = vadd.f32 %v868, %v1004
        %1006 = vdwg.mxu0
        %1007 = vmatprep.subr.mxu0 0.0
        %1008 = vmatpush1.msra.mxu0 0.0
        %1009 = vmatprep.subr.mxu0 0.0
        %1010 = vmatpush1.msra.mxu0 0.0
        %1011 = vmatprep.subr.mxu0 0.0
        %1012 = vmatpush1.msra.mxu0 0.0
        %1013 = vmatprep.subr.mxu0 0.0
        %1014 = vmatpush1.msra.mxu0 0.0
        %1015 = vmatprep.subr.mxu0 0.0
        %1016 = vmatpush1.msra.mxu0 0.0
        %1017 = vmatprep.subr.mxu0 0.0
        %1018 = vmatpush1.msra.mxu0 0.0
        %1019 = vmatprep.subr.mxu0 0.0
        %1020 = vmatpush1.msra.mxu0 0.0
        %1021 = vmatprep.subr.mxu0 0.0
        %1022 = vmatpush1.msra.mxu0 0.0
        %1023 = vmatprep.subr.mxu0 %v828
        %1024 = vmatpush1.msra.mxu0 %v827
        %1025 = vmatprep.subr.mxu0 %v824
        %1026 = vmatpush1.msra.mxu0 %v823
        %1027 = vmatprep.subr.mxu0 %v820
        %1028 = vmatpush1.msra.mxu0 %v819
        %1029 = vmatprep.subr.mxu0 %v816
        %1030 = vmatpush1.msra.mxu0 %v815
        %1031 = vmatprep.subr.mxu0 %v812
        %1032 = vmatpush1.msra.mxu0 %v811
        %1033 = vmatprep.subr.mxu0 %v808
        %1034 = vmatpush1.msra.mxu0 %v807
        %1035 = vmatprep.subr.mxu0 %v804
        %1036 = vmatpush1.msra.mxu0 %v803
        %1037 = vmatprep.subr.mxu0 %v800
        %1038 = vmatpush1.msra.mxu0 %v799
        %1039 = vmatprep.subr.mxu0 0.0
        %1040 = vmatpush2.msra.mxu0 0.0
        %1041 = vmatprep.subr.mxu0 0.0
        %1042 = vmatpush2.msra.mxu0 0.0
        %1043 = vmatprep.subr.mxu0 0.0
        %1044 = vmatpush2.msra.mxu0 0.0
        %1045 = vmatprep.subr.mxu0 0.0
        %1046 = vmatpush2.msra.mxu0 0.0
        %1047 = vmatprep.subr.mxu0 0.0
        %1048 = vmatpush2.msra.mxu0 0.0
        %1049 = vmatprep.subr.mxu0 0.0
        %1050 = vmatpush2.msra.mxu0 0.0
        %1051 = vmatprep.subr.mxu0 0.0
        %1052 = vmatpush2.msra.mxu0 0.0
        %1053 = vmatprep.subr.mxu0 0.0
        %1054 = vmatpush2.msra.mxu0 0.0
        %1055 = vmatprep.subr.mxu0 0.0
        %1056 = vmatpush2.msra.mxu0 0.0
        %1057 = vmatprep.subr.mxu0 0.0
        %1058 = vmatpush2.msra.mxu0 0.0
        %1059 = vmatprep.subr.mxu0 0.0
        %1060 = vmatpush2.msra.mxu0 0.0
        %1061 = vmatprep.subr.mxu0 0.0
        %1062 = vmatpush2.msra.mxu0 0.0
        %1063 = vmatprep.subr.mxu0 0.0
        %1064 = vmatpush2.msra.mxu0 0.0
        %1065 = vmatprep.subr.mxu0 0.0
        %1066 = vmatpush2.msra.mxu0 0.0
        %1067 = vmatprep.subr.mxu0 0.0
        %1068 = vmatpush2.msra.mxu0 0.0
        %1069 = vmatprep.subr.mxu0 0.0
        %1070 = vmatpush2.msra.mxu0 0.0
        %1071 = vmatprep.mubr.f32.mxu0 0.0
        %1072 = vmatmul.mubr.f32.gmra.mxu0 %v871
        %v1073 = vpop.f32.mrf.mxu0
        %v1074 = vadd.f32 %v840, %v1073
        %v1075 = vpop.f32.mrf.mxu0
        %v1076 = vadd.f32 %v840, %v1075
        %1077 = vmatprep.mubr.f32.mxu0 0.0
        %1078 = vmatmul.mubr.f32.gmra.mxu0 %v874
        %v1079 = vpop.f32.mrf.mxu0
        %v1080 = vadd.f32 %v844, %v1079
        %v1081 = vpop.f32.mrf.mxu0
        %v1082 = vadd.f32 %v844, %v1081
        %1083 = vmatprep.mubr.f32.mxu0 0.0
        %1084 = vmatmul.mubr.f32.gmra.mxu0 %v877
        %v1085 = vpop.f32.mrf.mxu0
        %v1086 = vadd.f32 %v848, %v1085
        %v1087 = vpop.f32.mrf.mxu0
        %v1088 = vadd.f32 %v848, %v1087
        %1089 = vmatprep.mubr.f32.mxu0 0.0
        %1090 = vmatmul.mubr.f32.gmra.mxu0 %v880
        %v1091 = vpop.f32.mrf.mxu0
        %v1092 = vadd.f32 %v852, %v1091
        %v1093 = vpop.f32.mrf.mxu0
        %v1094 = vadd.f32 %v852, %v1093
        %1095 = vmatprep.mubr.f32.mxu0 0.0
        %1096 = vmatmul.mubr.f32.gmra.mxu0 %v883
        %v1097 = vpop.f32.mrf.mxu0
        %v1098 = vadd.f32 %v856, %v1097
        %v1099 = vpop.f32.mrf.mxu0
        %v1100 = vadd.f32 %v856, %v1099
        %1101 = vmatprep.mubr.f32.mxu0 0.0
        %1102 = vmatmul.mubr.f32.gmra.mxu0 %v886
        %v1103 = vpop.f32.mrf.mxu0
        %v1104 = vadd.f32 %v860, %v1103
        %v1105 = vpop.f32.mrf.mxu0
        %v1106 = vadd.f32 %v860, %v1105
        %1107 = vmatprep.mubr.f32.mxu0 0.0
        %1108 = vmatmul.mubr.f32.gmra.mxu0 %v889
        %v1109 = vpop.f32.mrf.mxu0
        %v1110 = vadd.f32 %v864, %v1109
        %v1111 = vpop.f32.mrf.mxu0
        %v1112 = vadd.f32 %v864, %v1111
        %1113 = vmatprep.mubr.f32.mxu0 0.0
        %1114 = vmatmul.mubr.f32.gmra.mxu0 %v892
        %v1115 = vpop.f32.mrf.mxu0
        %v1116 = vadd.f32 %v868, %v1115
        %v1117 = vpop.f32.mrf.mxu0
        %v1118 = vadd.f32 %v868, %v1117
        %1119 = vdwg.mxu0
        %v1120 = vtanh.pop %v961
        %v1121 = vtanh.pop %v963
        %v1122 = vtanh.pop %v1074
        %v1123 = vtanh.pop %v1076
        %v1124 = vtanh.pop %v967
        %v1125 = vtanh.pop %v969
        %v1126 = vtanh.pop %v1080
        %v1127 = vtanh.pop %v1082
        %v1128 = vtanh.pop %v973
        %v1129 = vtanh.pop %v975
        %v1130 = vtanh.pop %v1086
        %v1131 = vtanh.pop %v1088
        %v1132 = vtanh.pop %v979
        %v1133 = vtanh.pop %v981
        %v1134 = vtanh.pop %v1092
        %v1135 = vtanh.pop %v1094
        %v1136 = vtanh.pop %v985
        %v1137 = vtanh.pop %v987
        %v1138 = vtanh.pop %v1098
        %v1139 = vtanh.pop %v1100
        %v1140 = vtanh.pop %v991
        %v1141 = vtanh.pop %v993
        %v1142 = vtanh.pop %v1104
        %v1143 = vtanh.pop %v1106
        %v1144 = vtanh.pop %v997
        %v1145 = vtanh.pop %v999
        %v1146 = vtanh.pop %v1110
        %v1147 = vtanh.pop %v1112
        %v1148 = vtanh.pop %v1003
        %v1149 = vtanh.pop %v1005
        %v1150 = vtanh.pop %v1116
        %v1151 = vtanh.pop %v1118
        %s1152 = scalar_lea.vmem [#allocation2], 128
        %v1153 = vld [vmem:[%s1152] sm:$0xff]
        %v1154 = vld [vmem:[%s1152 + $0x8] sm:$0xff]
        %v1155 = vld [vmem:[%s1152 + $0x10] sm:$0xff]
        %v1156 = vld [vmem:[%s1152 + $0x18] sm:$0xff]
        %v1157 = vld [vmem:[%s1152 + $0x20] sm:$0xff]
        %v1158 = vld [vmem:[%s1152 + $0x28] sm:$0xff]
        %v1159 = vld [vmem:[%s1152 + $0x30] sm:$0xff]
        %v1160 = vld [vmem:[%s1152 + $0x38] sm:$0xff]
        %1161 = vset.pattern.permute.xlu0 5
        %1162 = vperm.xlu0 %1161, %v192
        %v1163 = vpop.permute.xlu0 %1162
        %1165 = vset.pattern.permute.xlu0 5
        %1166 = vperm.xlu0 %1165, %v193
        %v1167 = vpop.permute.xlu0 %1166
        %1169 = vset.pattern.permute.xlu0 5
        %1170 = vperm.xlu0 %1169, %v194
        %v1171 = vpop.permute.xlu0 %1170
        %1173 = vset.pattern.permute.xlu0 5
        %1174 = vperm.xlu0 %1173, %v195
        %v1175 = vpop.permute.xlu0 %1174
        %1177 = vset.pattern.permute.xlu0 5
        %1178 = vperm.xlu0 %1177, %v196
        %v1179 = vpop.permute.xlu0 %1178
        %1181 = vset.pattern.permute.xlu0 5
        %1182 = vperm.xlu0 %1181, %v197
        %v1183 = vpop.permute.xlu0 %1182
        %1185 = vset.pattern.permute.xlu0 5
        %1186 = vperm.xlu0 %1185, %v198
        %v1187 = vpop.permute.xlu0 %1186
        %1189 = vset.pattern.permute.xlu0 5
        %1190 = vperm.xlu0 %1189, %v199
        %v1191 = vpop.permute.xlu0 %1190
        %v1194 = vsel %vm546, %v1153, 0
        %v1197 = vsel %vm546, %v1154, 0
        %v1200 = vsel %vm546, %v1155, 0
        %v1203 = vsel %vm546, %v1156, 0
        %v1206 = vsel %vm546, %v1157, 0
        %v1209 = vsel %vm546, %v1158, 0
        %v1212 = vsel %vm546, %v1159, 0
        %v1215 = vsel %vm546, %v1160, 0
        %1217 = vmatprep.subr.mxu0 0.0
        %1218 = vmatpush1.msra.mxu0 0.0
        %1219 = vmatprep.subr.mxu0 0.0
        %1220 = vmatpush1.msra.mxu0 0.0
        %1221 = vmatprep.subr.mxu0 0.0
        %1222 = vmatpush1.msra.mxu0 0.0
        %1223 = vmatprep.subr.mxu0 0.0
        %1224 = vmatpush1.msra.mxu0 0.0
        %1225 = vmatprep.subr.mxu0 0.0
        %1226 = vmatpush1.msra.mxu0 0.0
        %1227 = vmatprep.subr.mxu0 0.0
        %1228 = vmatpush1.msra.mxu0 0.0
        %1229 = vmatprep.subr.mxu0 0.0
        %1230 = vmatpush1.msra.mxu0 0.0
        %1231 = vmatprep.subr.mxu0 0.0
        %1232 = vmatpush1.msra.mxu0 0.0
        %1233 = vmatprep.subr.mxu0 %v1149
        %1234 = vmatpush1.msra.mxu0 %v1148
        %1235 = vmatprep.subr.mxu0 %v1145
        %1236 = vmatpush1.msra.mxu0 %v1144
        %1237 = vmatprep.subr.mxu0 %v1141
        %1238 = vmatpush1.msra.mxu0 %v1140
        %1239 = vmatprep.subr.mxu0 %v1137
        %1240 = vmatpush1.msra.mxu0 %v1136
        %1241 = vmatprep.subr.mxu0 %v1133
        %1242 = vmatpush1.msra.mxu0 %v1132
        %1243 = vmatprep.subr.mxu0 %v1129
        %1244 = vmatpush1.msra.mxu0 %v1128
        %1245 = vmatprep.subr.mxu0 %v1125
        %1246 = vmatpush1.msra.mxu0 %v1124
        %1247 = vmatprep.subr.mxu0 %v1121
        %1248 = vmatpush1.msra.mxu0 %v1120
        %1249 = vmatprep.subr.mxu0 0.0
        %1250 = vmatpush2.msra.mxu0 0.0
        %1251 = vmatprep.subr.mxu0 0.0
        %1252 = vmatpush2.msra.mxu0 0.0
        %1253 = vmatprep.subr.mxu0 0.0
        %1254 = vmatpush2.msra.mxu0 0.0
        %1255 = vmatprep.subr.mxu0 0.0
        %1256 = vmatpush2.msra.mxu0 0.0
        %1257 = vmatprep.subr.mxu0 0.0
        %1258 = vmatpush2.msra.mxu0 0.0
        %1259 = vmatprep.subr.mxu0 0.0
        %1260 = vmatpush2.msra.mxu0 0.0
        %1261 = vmatprep.subr.mxu0 0.0
        %1262 = vmatpush2.msra.mxu0 0.0
        %1263 = vmatprep.subr.mxu0 0.0
        %1264 = vmatpush2.msra.mxu0 0.0
        %1265 = vmatprep.subr.mxu0 0.0
        %1266 = vmatpush2.msra.mxu0 0.0
        %1267 = vmatprep.subr.mxu0 0.0
        %1268 = vmatpush2.msra.mxu0 0.0
        %1269 = vmatprep.subr.mxu0 0.0
        %1270 = vmatpush2.msra.mxu0 0.0
        %1271 = vmatprep.subr.mxu0 0.0
        %1272 = vmatpush2.msra.mxu0 0.0
        %1273 = vmatprep.subr.mxu0 0.0
        %1274 = vmatpush2.msra.mxu0 0.0
        %1275 = vmatprep.subr.mxu0 0.0
        %1276 = vmatpush2.msra.mxu0 0.0
        %1277 = vmatprep.subr.mxu0 0.0
        %1278 = vmatpush2.msra.mxu0 0.0
        %1279 = vmatprep.subr.mxu0 0.0
        %1280 = vmatpush2.msra.mxu0 0.0
        %1281 = vmatprep.mubr.f32.mxu0 0.0
        %1282 = vmatmul.mubr.f32.gmra.mxu0 %v1194
        %v1283 = vpop.f32.mrf.mxu0
        %v1284 = vadd.f32 %v1163, %v1283
        %v1285 = vpop.f32.mrf.mxu0
        %v1286 = vadd.f32 %v1163, %v1285
        %1287 = vmatprep.mubr.f32.mxu0 0.0
        %1288 = vmatmul.mubr.f32.gmra.mxu0 %v1197
        %v1289 = vpop.f32.mrf.mxu0
        %v1290 = vadd.f32 %v1167, %v1289
        %v1291 = vpop.f32.mrf.mxu0
        %v1292 = vadd.f32 %v1167, %v1291
        %1293 = vmatprep.mubr.f32.mxu0 0.0
        %1294 = vmatmul.mubr.f32.gmra.mxu0 %v1200
        %v1295 = vpop.f32.mrf.mxu0
        %v1296 = vadd.f32 %v1171, %v1295
        %v1297 = vpop.f32.mrf.mxu0
        %v1298 = vadd.f32 %v1171, %v1297
        %1299 = vmatprep.mubr.f32.mxu0 0.0
        %1300 = vmatmul.mubr.f32.gmra.mxu0 %v1203
        %v1301 = vpop.f32.mrf.mxu0
        %v1302 = vadd.f32 %v1175, %v1301
        %v1303 = vpop.f32.mrf.mxu0
        %v1304 = vadd.f32 %v1175, %v1303
        %1305 = vmatprep.mubr.f32.mxu0 0.0
        %1306 = vmatmul.mubr.f32.gmra.mxu0 %v1206
        %v1307 = vpop.f32.mrf.mxu0
        %v1308 = vadd.f32 %v1179, %v1307
        %v1309 = vpop.f32.mrf.mxu0
        %v1310 = vadd.f32 %v1179, %v1309
        %1311 = vmatprep.mubr.f32.mxu0 0.0
        %1312 = vmatmul.mubr.f32.gmra.mxu0 %v1209
        %v1313 = vpop.f32.mrf.mxu0
        %v1314 = vadd.f32 %v1183, %v1313
        %v1315 = vpop.f32.mrf.mxu0
        %v1316 = vadd.f32 %v1183, %v1315
        %1317 = vmatprep.mubr.f32.mxu0 0.0
        %1318 = vmatmul.mubr.f32.gmra.mxu0 %v1212
        %v1319 = vpop.f32.mrf.mxu0
        %v1320 = vadd.f32 %v1187, %v1319
        %v1321 = vpop.f32.mrf.mxu0
        %v1322 = vadd.f32 %v1187, %v1321
        %1323 = vmatprep.mubr.f32.mxu0 0.0
        %1324 = vmatmul.mubr.f32.gmra.mxu0 %v1215
        %v1325 = vpop.f32.mrf.mxu0
        %v1326 = vadd.f32 %v1191, %v1325
        %v1327 = vpop.f32.mrf.mxu0
        %v1328 = vadd.f32 %v1191, %v1327
        %1329 = vdwg.mxu0
        %1330 = vmatprep.subr.mxu0 0.0
        %1331 = vmatpush1.msra.mxu0 0.0
        %1332 = vmatprep.subr.mxu0 0.0
        %1333 = vmatpush1.msra.mxu0 0.0
        %1334 = vmatprep.subr.mxu0 0.0
        %1335 = vmatpush1.msra.mxu0 0.0
        %1336 = vmatprep.subr.mxu0 0.0
        %1337 = vmatpush1.msra.mxu0 0.0
        %1338 = vmatprep.subr.mxu0 0.0
        %1339 = vmatpush1.msra.mxu0 0.0
        %1340 = vmatprep.subr.mxu0 0.0
        %1341 = vmatpush1.msra.mxu0 0.0
        %1342 = vmatprep.subr.mxu0 0.0
        %1343 = vmatpush1.msra.mxu0 0.0
        %1344 = vmatprep.subr.mxu0 0.0
        %1345 = vmatpush1.msra.mxu0 0.0
        %1346 = vmatprep.subr.mxu0 %v1151
        %1347 = vmatpush1.msra.mxu0 %v1150
        %1348 = vmatprep.subr.mxu0 %v1147
        %1349 = vmatpush1.msra.mxu0 %v1146
        %1350 = vmatprep.subr.mxu0 %v1143
        %1351 = vmatpush1.msra.mxu0 %v1142
        %1352 = vmatprep.subr.mxu0 %v1139
        %1353 = vmatpush1.msra.mxu0 %v1138
        %1354 = vmatprep.subr.mxu0 %v1135
        %1355 = vmatpush1.msra.mxu0 %v1134
        %1356 = vmatprep.subr.mxu0 %v1131
        %1357 = vmatpush1.msra.mxu0 %v1130
        %1358 = vmatprep.subr.mxu0 %v1127
        %1359 = vmatpush1.msra.mxu0 %v1126
        %1360 = vmatprep.subr.mxu0 %v1123
        %1361 = vmatpush1.msra.mxu0 %v1122
        %1362 = vmatprep.subr.mxu0 0.0
        %1363 = vmatpush2.msra.mxu0 0.0
        %1364 = vmatprep.subr.mxu0 0.0
        %1365 = vmatpush2.msra.mxu0 0.0
        %1366 = vmatprep.subr.mxu0 0.0
        %1367 = vmatpush2.msra.mxu0 0.0
        %1368 = vmatprep.subr.mxu0 0.0
        %1369 = vmatpush2.msra.mxu0 0.0
        %1370 = vmatprep.subr.mxu0 0.0
        %1371 = vmatpush2.msra.mxu0 0.0
        %1372 = vmatprep.subr.mxu0 0.0
        %1373 = vmatpush2.msra.mxu0 0.0
        %1374 = vmatprep.subr.mxu0 0.0
        %1375 = vmatpush2.msra.mxu0 0.0
        %1376 = vmatprep.subr.mxu0 0.0
        %1377 = vmatpush2.msra.mxu0 0.0
        %1378 = vmatprep.subr.mxu0 0.0
        %1379 = vmatpush2.msra.mxu0 0.0
        %1380 = vmatprep.subr.mxu0 0.0
        %1381 = vmatpush2.msra.mxu0 0.0
        %1382 = vmatprep.subr.mxu0 0.0
        %1383 = vmatpush2.msra.mxu0 0.0
        %1384 = vmatprep.subr.mxu0 0.0
        %1385 = vmatpush2.msra.mxu0 0.0
        %1386 = vmatprep.subr.mxu0 0.0
        %1387 = vmatpush2.msra.mxu0 0.0
        %1388 = vmatprep.subr.mxu0 0.0
        %1389 = vmatpush2.msra.mxu0 0.0
        %1390 = vmatprep.subr.mxu0 0.0
        %1391 = vmatpush2.msra.mxu0 0.0
        %1392 = vmatprep.subr.mxu0 0.0
        %1393 = vmatpush2.msra.mxu0 0.0
        %1394 = vmatprep.mubr.f32.mxu0 0.0
        %1395 = vmatmul.mubr.f32.gmra.mxu0 %v1194
        %v1396 = vpop.f32.mrf.mxu0
        %v1397 = vadd.f32 %v1163, %v1396
        %v1398 = vpop.f32.mrf.mxu0
        %v1399 = vadd.f32 %v1163, %v1398
        %1400 = vmatprep.mubr.f32.mxu0 0.0
        %1401 = vmatmul.mubr.f32.gmra.mxu0 %v1197
        %v1402 = vpop.f32.mrf.mxu0
        %v1403 = vadd.f32 %v1167, %v1402
        %v1404 = vpop.f32.mrf.mxu0
        %v1405 = vadd.f32 %v1167, %v1404
        %1406 = vmatprep.mubr.f32.mxu0 0.0
        %1407 = vmatmul.mubr.f32.gmra.mxu0 %v1200
        %v1408 = vpop.f32.mrf.mxu0
        %v1409 = vadd.f32 %v1171, %v1408
        %v1410 = vpop.f32.mrf.mxu0
        %v1411 = vadd.f32 %v1171, %v1410
        %1412 = vmatprep.mubr.f32.mxu0 0.0
        %1413 = vmatmul.mubr.f32.gmra.mxu0 %v1203
        %v1414 = vpop.f32.mrf.mxu0
        %v1415 = vadd.f32 %v1175, %v1414
        %v1416 = vpop.f32.mrf.mxu0
        %v1417 = vadd.f32 %v1175, %v1416
        %1418 = vmatprep.mubr.f32.mxu0 0.0
        %1419 = vmatmul.mubr.f32.gmra.mxu0 %v1206
        %v1420 = vpop.f32.mrf.mxu0
        %v1421 = vadd.f32 %v1179, %v1420
        %v1422 = vpop.f32.mrf.mxu0
        %v1423 = vadd.f32 %v1179, %v1422
        %1424 = vmatprep.mubr.f32.mxu0 0.0
        %1425 = vmatmul.mubr.f32.gmra.mxu0 %v1209
        %v1426 = vpop.f32.mrf.mxu0
        %v1427 = vadd.f32 %v1183, %v1426
        %v1428 = vpop.f32.mrf.mxu0
        %v1429 = vadd.f32 %v1183, %v1428
        %1430 = vmatprep.mubr.f32.mxu0 0.0
        %1431 = vmatmul.mubr.f32.gmra.mxu0 %v1212
        %v1432 = vpop.f32.mrf.mxu0
        %v1433 = vadd.f32 %v1187, %v1432
        %v1434 = vpop.f32.mrf.mxu0
        %v1435 = vadd.f32 %v1187, %v1434
        %1436 = vmatprep.mubr.f32.mxu0 0.0
        %1437 = vmatmul.mubr.f32.gmra.mxu0 %v1215
        %v1438 = vpop.f32.mrf.mxu0
        %v1439 = vadd.f32 %v1191, %v1438
        %v1440 = vpop.f32.mrf.mxu0
        %v1441 = vadd.f32 %v1191, %v1440
        %1442 = vdwg.mxu0
        %v1443 = vtanh.pop %v1284
        %v1444 = vtanh.pop %v1286
        %v1445 = vtanh.pop %v1397
        %v1446 = vtanh.pop %v1399
        %v1447 = vtanh.pop %v1290
        %v1448 = vtanh.pop %v1292
        %v1449 = vtanh.pop %v1403
        %v1450 = vtanh.pop %v1405
        %v1451 = vtanh.pop %v1296
        %v1452 = vtanh.pop %v1298
        %v1453 = vtanh.pop %v1409
        %v1454 = vtanh.pop %v1411
        %v1455 = vtanh.pop %v1302
        %v1456 = vtanh.pop %v1304
        %v1457 = vtanh.pop %v1415
        %v1458 = vtanh.pop %v1417
        %v1459 = vtanh.pop %v1308
        %v1460 = vtanh.pop %v1310
        %v1461 = vtanh.pop %v1421
        %v1462 = vtanh.pop %v1423
        %v1463 = vtanh.pop %v1314
        %v1464 = vtanh.pop %v1316
        %v1465 = vtanh.pop %v1427
        %v1466 = vtanh.pop %v1429
        %v1467 = vtanh.pop %v1320
        %v1468 = vtanh.pop %v1322
        %v1469 = vtanh.pop %v1433
        %v1470 = vtanh.pop %v1435
        %v1471 = vtanh.pop %v1326
        %v1472 = vtanh.pop %v1328
        %v1473 = vtanh.pop %v1439
        %v1474 = vtanh.pop %v1441
        %s1475 = scalar_lea.vmem [#allocation2], 192
        %v1476 = vld [vmem:[%s1475] sm:$0xff]
        %v1477 = vld [vmem:[%s1475 + $0x8] sm:$0xff]
        %v1478 = vld [vmem:[%s1475 + $0x10] sm:$0xff]
        %v1479 = vld [vmem:[%s1475 + $0x18] sm:$0xff]
        %v1480 = vld [vmem:[%s1475 + $0x20] sm:$0xff]
        %v1481 = vld [vmem:[%s1475 + $0x28] sm:$0xff]
        %v1482 = vld [vmem:[%s1475 + $0x30] sm:$0xff]
        %v1483 = vld [vmem:[%s1475 + $0x38] sm:$0xff]
        %1484 = vset.pattern.permute.xlu0 6
        %1485 = vperm.xlu0 %1484, %v192
        %v1486 = vpop.permute.xlu0 %1485
        %1488 = vset.pattern.permute.xlu0 6
        %1489 = vperm.xlu0 %1488, %v193
        %v1490 = vpop.permute.xlu0 %1489
        %1492 = vset.pattern.permute.xlu0 6
        %1493 = vperm.xlu0 %1492, %v194
        %v1494 = vpop.permute.xlu0 %1493
        %1496 = vset.pattern.permute.xlu0 6
        %1497 = vperm.xlu0 %1496, %v195
        %v1498 = vpop.permute.xlu0 %1497
        %1500 = vset.pattern.permute.xlu0 6
        %1501 = vperm.xlu0 %1500, %v196
        %v1502 = vpop.permute.xlu0 %1501
        %1504 = vset.pattern.permute.xlu0 6
        %1505 = vperm.xlu0 %1504, %v197
        %v1506 = vpop.permute.xlu0 %1505
        %1508 = vset.pattern.permute.xlu0 6
        %1509 = vperm.xlu0 %1508, %v198
        %v1510 = vpop.permute.xlu0 %1509
        %1512 = vset.pattern.permute.xlu0 6
        %1513 = vperm.xlu0 %1512, %v199
        %v1514 = vpop.permute.xlu0 %1513
        %v1517 = vsel %vm546, %v1476, 0
        %v1520 = vsel %vm546, %v1477, 0
        %v1523 = vsel %vm546, %v1478, 0
        %v1526 = vsel %vm546, %v1479, 0
        %v1529 = vsel %vm546, %v1480, 0
        %v1532 = vsel %vm546, %v1481, 0
        %v1535 = vsel %vm546, %v1482, 0
        %v1538 = vsel %vm546, %v1483, 0
        %1540 = vmatprep.subr.mxu0 0.0
        %1541 = vmatpush1.msra.mxu0 0.0
        %1542 = vmatprep.subr.mxu0 0.0
        %1543 = vmatpush1.msra.mxu0 0.0
        %1544 = vmatprep.subr.mxu0 0.0
        %1545 = vmatpush1.msra.mxu0 0.0
        %1546 = vmatprep.subr.mxu0 0.0
        %1547 = vmatpush1.msra.mxu0 0.0
        %1548 = vmatprep.subr.mxu0 0.0
        %1549 = vmatpush1.msra.mxu0 0.0
        %1550 = vmatprep.subr.mxu0 0.0
        %1551 = vmatpush1.msra.mxu0 0.0
        %1552 = vmatprep.subr.mxu0 0.0
        %1553 = vmatpush1.msra.mxu0 0.0
        %1554 = vmatprep.subr.mxu0 0.0
        %1555 = vmatpush1.msra.mxu0 0.0
        %1556 = vmatprep.subr.mxu0 %v1472
        %1557 = vmatpush1.msra.mxu0 %v1471
        %1558 = vmatprep.subr.mxu0 %v1468
        %1559 = vmatpush1.msra.mxu0 %v1467
        %1560 = vmatprep.subr.mxu0 %v1464
        %1561 = vmatpush1.msra.mxu0 %v1463
        %1562 = vmatprep.subr.mxu0 %v1460
        %1563 = vmatpush1.msra.mxu0 %v1459
        %1564 = vmatprep.subr.mxu0 %v1456
        %1565 = vmatpush1.msra.mxu0 %v1455
        %1566 = vmatprep.subr.mxu0 %v1452
        %1567 = vmatpush1.msra.mxu0 %v1451
        %1568 = vmatprep.subr.mxu0 %v1448
        %1569 = vmatpush1.msra.mxu0 %v1447
        %1570 = vmatprep.subr.mxu0 %v1444
        %1571 = vmatpush1.msra.mxu0 %v1443
        %1572 = vmatprep.subr.mxu0 0.0
        %1573 = vmatpush2.msra.mxu0 0.0
        %1574 = vmatprep.subr.mxu0 0.0
        %1575 = vmatpush2.msra.mxu0 0.0
        %1576 = vmatprep.subr.mxu0 0.0
        %1577 = vmatpush2.msra.mxu0 0.0
        %1578 = vmatprep.subr.mxu0 0.0
        %1579 = vmatpush2.msra.mxu0 0.0
        %1580 = vmatprep.subr.mxu0 0.0
        %1581 = vmatpush2.msra.mxu0 0.0
        %1582 = vmatprep.subr.mxu0 0.0
        %1583 = vmatpush2.msra.mxu0 0.0
        %1584 = vmatprep.subr.mxu0 0.0
        %1585 = vmatpush2.msra.mxu0 0.0
        %1586 = vmatprep.subr.mxu0 0.0
        %1587 = vmatpush2.msra.mxu0 0.0
        %1588 = vmatprep.subr.mxu0 0.0
        %1589 = vmatpush2.msra.mxu0 0.0
        %1590 = vmatprep.subr.mxu0 0.0
        %1591 = vmatpush2.msra.mxu0 0.0
        %1592 = vmatprep.subr.mxu0 0.0
        %1593 = vmatpush2.msra.mxu0 0.0
        %1594 = vmatprep.subr.mxu0 0.0
        %1595 = vmatpush2.msra.mxu0 0.0
        %1596 = vmatprep.subr.mxu0 0.0
        %1597 = vmatpush2.msra.mxu0 0.0
        %1598 = vmatprep.subr.mxu0 0.0
        %1599 = vmatpush2.msra.mxu0 0.0
        %1600 = vmatprep.subr.mxu0 0.0
        %1601 = vmatpush2.msra.mxu0 0.0
        %1602 = vmatprep.subr.mxu0 0.0
        %1603 = vmatpush2.msra.mxu0 0.0
        %1604 = vmatprep.mubr.f32.mxu0 0.0
        %1605 = vmatmul.mubr.f32.gmra.mxu0 %v1517
        %v1606 = vpop.f32.mrf.mxu0
        %v1607 = vadd.f32 %v1486, %v1606
        %v1608 = vpop.f32.mrf.mxu0
        %v1609 = vadd.f32 %v1486, %v1608
        %1610 = vmatprep.mubr.f32.mxu0 0.0
        %1611 = vmatmul.mubr.f32.gmra.mxu0 %v1520
        %v1612 = vpop.f32.mrf.mxu0
        %v1613 = vadd.f32 %v1490, %v1612
        %v1614 = vpop.f32.mrf.mxu0
        %v1615 = vadd.f32 %v1490, %v1614
        %1616 = vmatprep.mubr.f32.mxu0 0.0
        %1617 = vmatmul.mubr.f32.gmra.mxu0 %v1523
        %v1618 = vpop.f32.mrf.mxu0
        %v1619 = vadd.f32 %v1494, %v1618
        %v1620 = vpop.f32.mrf.mxu0
        %v1621 = vadd.f32 %v1494, %v1620
        %1622 = vmatprep.mubr.f32.mxu0 0.0
        %1623 = vmatmul.mubr.f32.gmra.mxu0 %v1526
        %v1624 = vpop.f32.mrf.mxu0
        %v1625 = vadd.f32 %v1498, %v1624
        %v1626 = vpop.f32.mrf.mxu0
        %v1627 = vadd.f32 %v1498, %v1626
        %1628 = vmatprep.mubr.f32.mxu0 0.0
        %1629 = vmatmul.mubr.f32.gmra.mxu0 %v1529
        %v1630 = vpop.f32.mrf.mxu0
        %v1631 = vadd.f32 %v1502, %v1630
        %v1632 = vpop.f32.mrf.mxu0
        %v1633 = vadd.f32 %v1502, %v1632
        %1634 = vmatprep.mubr.f32.mxu0 0.0
        %1635 = vmatmul.mubr.f32.gmra.mxu0 %v1532
        %v1636 = vpop.f32.mrf.mxu0
        %v1637 = vadd.f32 %v1506, %v1636
        %v1638 = vpop.f32.mrf.mxu0
        %v1639 = vadd.f32 %v1506, %v1638
        %1640 = vmatprep.mubr.f32.mxu0 0.0
        %1641 = vmatmul.mubr.f32.gmra.mxu0 %v1535
        %v1642 = vpop.f32.mrf.mxu0
        %v1643 = vadd.f32 %v1510, %v1642
        %v1644 = vpop.f32.mrf.mxu0
        %v1645 = vadd.f32 %v1510, %v1644
        %1646 = vmatprep.mubr.f32.mxu0 0.0
        %1647 = vmatmul.mubr.f32.gmra.mxu0 %v1538
        %v1648 = vpop.f32.mrf.mxu0
        %v1649 = vadd.f32 %v1514, %v1648
        %v1650 = vpop.f32.mrf.mxu0
        %v1651 = vadd.f32 %v1514, %v1650
        %1652 = vdwg.mxu0
        %1653 = vmatprep.subr.mxu0 0.0
        %1654 = vmatpush1.msra.mxu0 0.0
        %1655 = vmatprep.subr.mxu0 0.0
        %1656 = vmatpush1.msra.mxu0 0.0
        %1657 = vmatprep.subr.mxu0 0.0
        %1658 = vmatpush1.msra.mxu0 0.0
        %1659 = vmatprep.subr.mxu0 0.0
        %1660 = vmatpush1.msra.mxu0 0.0
        %1661 = vmatprep.subr.mxu0 0.0
        %1662 = vmatpush1.msra.mxu0 0.0
        %1663 = vmatprep.subr.mxu0 0.0
        %1664 = vmatpush1.msra.mxu0 0.0
        %1665 = vmatprep.subr.mxu0 0.0
        %1666 = vmatpush1.msra.mxu0 0.0
        %1667 = vmatprep.subr.mxu0 0.0
        %1668 = vmatpush1.msra.mxu0 0.0
        %1669 = vmatprep.subr.mxu0 %v1474
        %1670 = vmatpush1.msra.mxu0 %v1473
        %1671 = vmatprep.subr.mxu0 %v1470
        %1672 = vmatpush1.msra.mxu0 %v1469
        %1673 = vmatprep.subr.mxu0 %v1466
        %1674 = vmatpush1.msra.mxu0 %v1465
        %1675 = vmatprep.subr.mxu0 %v1462
        %1676 = vmatpush1.msra.mxu0 %v1461
        %1677 = vmatprep.subr.mxu0 %v1458
        %1678 = vmatpush1.msra.mxu0 %v1457
        %1679 = vmatprep.subr.mxu0 %v1454
        %1680 = vmatpush1.msra.mxu0 %v1453
        %1681 = vmatprep.subr.mxu0 %v1450
        %1682 = vmatpush1.msra.mxu0 %v1449
        %1683 = vmatprep.subr.mxu0 %v1446
        %1684 = vmatpush1.msra.mxu0 %v1445
        %1685 = vmatprep.subr.mxu0 0.0
        %1686 = vmatpush2.msra.mxu0 0.0
        %1687 = vmatprep.subr.mxu0 0.0
        %1688 = vmatpush2.msra.mxu0 0.0
        %1689 = vmatprep.subr.mxu0 0.0
        %1690 = vmatpush2.msra.mxu0 0.0
        %1691 = vmatprep.subr.mxu0 0.0
        %1692 = vmatpush2.msra.mxu0 0.0
        %1693 = vmatprep.subr.mxu0 0.0
        %1694 = vmatpush2.msra.mxu0 0.0
        %1695 = vmatprep.subr.mxu0 0.0
        %1696 = vmatpush2.msra.mxu0 0.0
        %1697 = vmatprep.subr.mxu0 0.0
        %1698 = vmatpush2.msra.mxu0 0.0
        %1699 = vmatprep.subr.mxu0 0.0
        %1700 = vmatpush2.msra.mxu0 0.0
        %1701 = vmatprep.subr.mxu0 0.0
        %1702 = vmatpush2.msra.mxu0 0.0
        %1703 = vmatprep.subr.mxu0 0.0
        %1704 = vmatpush2.msra.mxu0 0.0
        %1705 = vmatprep.subr.mxu0 0.0
        %1706 = vmatpush2.msra.mxu0 0.0
        %1707 = vmatprep.subr.mxu0 0.0
        %1708 = vmatpush2.msra.mxu0 0.0
        %1709 = vmatprep.subr.mxu0 0.0
        %1710 = vmatpush2.msra.mxu0 0.0
        %1711 = vmatprep.subr.mxu0 0.0
        %1712 = vmatpush2.msra.mxu0 0.0
        %1713 = vmatprep.subr.mxu0 0.0
        %1714 = vmatpush2.msra.mxu0 0.0
        %1715 = vmatprep.subr.mxu0 0.0
        %1716 = vmatpush2.msra.mxu0 0.0
        %1717 = vmatprep.mubr.f32.mxu0 0.0
        %1718 = vmatmul.mubr.f32.gmra.mxu0 %v1517
        %v1719 = vpop.f32.mrf.mxu0
        %v1720 = vadd.f32 %v1486, %v1719
        %v1721 = vpop.f32.mrf.mxu0
        %v1722 = vadd.f32 %v1486, %v1721
        %1723 = vmatprep.mubr.f32.mxu0 0.0
        %1724 = vmatmul.mubr.f32.gmra.mxu0 %v1520
        %v1725 = vpop.f32.mrf.mxu0
        %v1726 = vadd.f32 %v1490, %v1725
        %v1727 = vpop.f32.mrf.mxu0
        %v1728 = vadd.f32 %v1490, %v1727
        %1729 = vmatprep.mubr.f32.mxu0 0.0
        %1730 = vmatmul.mubr.f32.gmra.mxu0 %v1523
        %v1731 = vpop.f32.mrf.mxu0
        %v1732 = vadd.f32 %v1494, %v1731
        %v1733 = vpop.f32.mrf.mxu0
        %v1734 = vadd.f32 %v1494, %v1733
        %1735 = vmatprep.mubr.f32.mxu0 0.0
        %1736 = vmatmul.mubr.f32.gmra.mxu0 %v1526
        %v1737 = vpop.f32.mrf.mxu0
        %v1738 = vadd.f32 %v1498, %v1737
        %v1739 = vpop.f32.mrf.mxu0
        %v1740 = vadd.f32 %v1498, %v1739
        %1741 = vmatprep.mubr.f32.mxu0 0.0
        %1742 = vmatmul.mubr.f32.gmra.mxu0 %v1529
        %v1743 = vpop.f32.mrf.mxu0
        %v1744 = vadd.f32 %v1502, %v1743
        %v1745 = vpop.f32.mrf.mxu0
        %v1746 = vadd.f32 %v1502, %v1745
        %1747 = vmatprep.mubr.f32.mxu0 0.0
        %1748 = vmatmul.mubr.f32.gmra.mxu0 %v1532
        %v1749 = vpop.f32.mrf.mxu0
        %v1750 = vadd.f32 %v1506, %v1749
        %v1751 = vpop.f32.mrf.mxu0
        %v1752 = vadd.f32 %v1506, %v1751
        %1753 = vmatprep.mubr.f32.mxu0 0.0
        %1754 = vmatmul.mubr.f32.gmra.mxu0 %v1535
        %v1755 = vpop.f32.mrf.mxu0
        %v1756 = vadd.f32 %v1510, %v1755
        %v1757 = vpop.f32.mrf.mxu0
        %v1758 = vadd.f32 %v1510, %v1757
        %1759 = vmatprep.mubr.f32.mxu0 0.0
        %1760 = vmatmul.mubr.f32.gmra.mxu0 %v1538
        %v1761 = vpop.f32.mrf.mxu0
        %v1762 = vadd.f32 %v1514, %v1761
        %v1763 = vpop.f32.mrf.mxu0
        %v1764 = vadd.f32 %v1514, %v1763
        %1765 = vdwg.mxu0
        %v1766 = vtanh.pop %v1607
        %v1767 = vtanh.pop %v1609
        %v1768 = vtanh.pop %v1720
        %v1769 = vtanh.pop %v1722
        %v1770 = vtanh.pop %v1613
        %v1771 = vtanh.pop %v1615
        %v1772 = vtanh.pop %v1726
        %v1773 = vtanh.pop %v1728
        %v1774 = vtanh.pop %v1619
        %v1775 = vtanh.pop %v1621
        %v1776 = vtanh.pop %v1732
        %v1777 = vtanh.pop %v1734
        %v1778 = vtanh.pop %v1625
        %v1779 = vtanh.pop %v1627
        %v1780 = vtanh.pop %v1738
        %v1781 = vtanh.pop %v1740
        %v1782 = vtanh.pop %v1631
        %v1783 = vtanh.pop %v1633
        %v1784 = vtanh.pop %v1744
        %v1785 = vtanh.pop %v1746
        %v1786 = vtanh.pop %v1637
        %v1787 = vtanh.pop %v1639
        %v1788 = vtanh.pop %v1750
        %v1789 = vtanh.pop %v1752
        %v1790 = vtanh.pop %v1643
        %v1791 = vtanh.pop %v1645
        %v1792 = vtanh.pop %v1756
        %v1793 = vtanh.pop %v1758
        %v1794 = vtanh.pop %v1649
        %v1795 = vtanh.pop %v1651
        %v1796 = vtanh.pop %v1762
        %v1797 = vtanh.pop %v1764
        %s1798 = scalar_lea.vmem [#allocation2], 256
        %v1799 = vld [vmem:[%s1798] sm:$0xff]
        %v1800 = vld [vmem:[%s1798 + $0x8] sm:$0xff]
        %v1801 = vld [vmem:[%s1798 + $0x10] sm:$0xff]
        %v1802 = vld [vmem:[%s1798 + $0x18] sm:$0xff]
        %v1803 = vld [vmem:[%s1798 + $0x20] sm:$0xff]
        %v1804 = vld [vmem:[%s1798 + $0x28] sm:$0xff]
        %v1805 = vld [vmem:[%s1798 + $0x30] sm:$0xff]
        %v1806 = vld [vmem:[%s1798 + $0x38] sm:$0xff]
        %1807 = vset.pattern.permute.xlu0 7
        %1808 = vperm.xlu0 %1807, %v192
        %v1809 = vpop.permute.xlu0 %1808
        %1811 = vset.pattern.permute.xlu0 7
        %1812 = vperm.xlu0 %1811, %v193
        %v1813 = vpop.permute.xlu0 %1812
        %1815 = vset.pattern.permute.xlu0 7
        %1816 = vperm.xlu0 %1815, %v194
        %v1817 = vpop.permute.xlu0 %1816
        %1819 = vset.pattern.permute.xlu0 7
        %1820 = vperm.xlu0 %1819, %v195
        %v1821 = vpop.permute.xlu0 %1820
        %1823 = vset.pattern.permute.xlu0 7
        %1824 = vperm.xlu0 %1823, %v196
        %v1825 = vpop.permute.xlu0 %1824
        %1827 = vset.pattern.permute.xlu0 7
        %1828 = vperm.xlu0 %1827, %v197
        %v1829 = vpop.permute.xlu0 %1828
        %1831 = vset.pattern.permute.xlu0 7
        %1832 = vperm.xlu0 %1831, %v198
        %v1833 = vpop.permute.xlu0 %1832
        %1835 = vset.pattern.permute.xlu0 7
        %1836 = vperm.xlu0 %1835, %v199
        %v1837 = vpop.permute.xlu0 %1836
        %v1840 = vsel %vm546, %v1799, 0
        %v1843 = vsel %vm546, %v1800, 0
        %v1846 = vsel %vm546, %v1801, 0
        %v1849 = vsel %vm546, %v1802, 0
        %v1852 = vsel %vm546, %v1803, 0
        %v1855 = vsel %vm546, %v1804, 0
        %v1858 = vsel %vm546, %v1805, 0
        %v1861 = vsel %vm546, %v1806, 0
        %1863 = vmatprep.subr.mxu0 0.0
        %1864 = vmatpush1.msra.mxu0 0.0
        %1865 = vmatprep.subr.mxu0 0.0
        %1866 = vmatpush1.msra.mxu0 0.0
        %1867 = vmatprep.subr.mxu0 0.0
        %1868 = vmatpush1.msra.mxu0 0.0
        %1869 = vmatprep.subr.mxu0 0.0
        %1870 = vmatpush1.msra.mxu0 0.0
        %1871 = vmatprep.subr.mxu0 0.0
        %1872 = vmatpush1.msra.mxu0 0.0
        %1873 = vmatprep.subr.mxu0 0.0
        %1874 = vmatpush1.msra.mxu0 0.0
        %1875 = vmatprep.subr.mxu0 0.0
        %1876 = vmatpush1.msra.mxu0 0.0
        %1877 = vmatprep.subr.mxu0 0.0
        %1878 = vmatpush1.msra.mxu0 0.0
        %1879 = vmatprep.subr.mxu0 %v1795
        %1880 = vmatpush1.msra.mxu0 %v1794
        %1881 = vmatprep.subr.mxu0 %v1791
        %1882 = vmatpush1.msra.mxu0 %v1790
        %1883 = vmatprep.subr.mxu0 %v1787
        %1884 = vmatpush1.msra.mxu0 %v1786
        %1885 = vmatprep.subr.mxu0 %v1783
        %1886 = vmatpush1.msra.mxu0 %v1782
        %1887 = vmatprep.subr.mxu0 %v1779
        %1888 = vmatpush1.msra.mxu0 %v1778
        %1889 = vmatprep.subr.mxu0 %v1775
        %1890 = vmatpush1.msra.mxu0 %v1774
        %1891 = vmatprep.subr.mxu0 %v1771
        %1892 = vmatpush1.msra.mxu0 %v1770
        %1893 = vmatprep.subr.mxu0 %v1767
        %1894 = vmatpush1.msra.mxu0 %v1766
        %1895 = vmatprep.subr.mxu0 0.0
        %1896 = vmatpush2.msra.mxu0 0.0
        %1897 = vmatprep.subr.mxu0 0.0
        %1898 = vmatpush2.msra.mxu0 0.0
        %1899 = vmatprep.subr.mxu0 0.0
        %1900 = vmatpush2.msra.mxu0 0.0
        %1901 = vmatprep.subr.mxu0 0.0
        %1902 = vmatpush2.msra.mxu0 0.0
        %1903 = vmatprep.subr.mxu0 0.0
        %1904 = vmatpush2.msra.mxu0 0.0
        %1905 = vmatprep.subr.mxu0 0.0
        %1906 = vmatpush2.msra.mxu0 0.0
        %1907 = vmatprep.subr.mxu0 0.0
        %1908 = vmatpush2.msra.mxu0 0.0
        %1909 = vmatprep.subr.mxu0 0.0
        %1910 = vmatpush2.msra.mxu0 0.0
        %1911 = vmatprep.subr.mxu0 0.0
        %1912 = vmatpush2.msra.mxu0 0.0
        %1913 = vmatprep.subr.mxu0 0.0
        %1914 = vmatpush2.msra.mxu0 0.0
        %1915 = vmatprep.subr.mxu0 0.0
        %1916 = vmatpush2.msra.mxu0 0.0
        %1917 = vmatprep.subr.mxu0 0.0
        %1918 = vmatpush2.msra.mxu0 0.0
        %1919 = vmatprep.subr.mxu0 0.0
        %1920 = vmatpush2.msra.mxu0 0.0
        %1921 = vmatprep.subr.mxu0 0.0
        %1922 = vmatpush2.msra.mxu0 0.0
        %1923 = vmatprep.subr.mxu0 0.0
        %1924 = vmatpush2.msra.mxu0 0.0
        %1925 = vmatprep.subr.mxu0 0.0
        %1926 = vmatpush2.msra.mxu0 0.0
        %1927 = vmatprep.mubr.f32.mxu0 0.0
        %1928 = vmatmul.mubr.f32.gmra.mxu0 %v1840
        %v1929 = vpop.f32.mrf.mxu0
        %v1930 = vadd.f32 %v1809, %v1929
        %v1931 = vpop.f32.mrf.mxu0
        %v1932 = vadd.f32 %v1809, %v1931
        %1933 = vmatprep.mubr.f32.mxu0 0.0
        %1934 = vmatmul.mubr.f32.gmra.mxu0 %v1843
        %v1935 = vpop.f32.mrf.mxu0
        %v1936 = vadd.f32 %v1813, %v1935
        %v1937 = vpop.f32.mrf.mxu0
        %v1938 = vadd.f32 %v1813, %v1937
        %1939 = vmatprep.mubr.f32.mxu0 0.0
        %1940 = vmatmul.mubr.f32.gmra.mxu0 %v1846
        %v1941 = vpop.f32.mrf.mxu0
        %v1942 = vadd.f32 %v1817, %v1941
        %v1943 = vpop.f32.mrf.mxu0
        %v1944 = vadd.f32 %v1817, %v1943
        %1945 = vmatprep.mubr.f32.mxu0 0.0
        %1946 = vmatmul.mubr.f32.gmra.mxu0 %v1849
        %v1947 = vpop.f32.mrf.mxu0
        %v1948 = vadd.f32 %v1821, %v1947
        %v1949 = vpop.f32.mrf.mxu0
        %v1950 = vadd.f32 %v1821, %v1949
        %1951 = vmatprep.mubr.f32.mxu0 0.0
        %1952 = vmatmul.mubr.f32.gmra.mxu0 %v1852
        %v1953 = vpop.f32.mrf.mxu0
        %v1954 = vadd.f32 %v1825, %v1953
        %v1955 = vpop.f32.mrf.mxu0
        %v1956 = vadd.f32 %v1825, %v1955
        %1957 = vmatprep.mubr.f32.mxu0 0.0
        %1958 = vmatmul.mubr.f32.gmra.mxu0 %v1855
        %v1959 = vpop.f32.mrf.mxu0
        %v1960 = vadd.f32 %v1829, %v1959
        %v1961 = vpop.f32.mrf.mxu0
        %v1962 = vadd.f32 %v1829, %v1961
        %1963 = vmatprep.mubr.f32.mxu0 0.0
        %1964 = vmatmul.mubr.f32.gmra.mxu0 %v1858
        %v1965 = vpop.f32.mrf.mxu0
        %v1966 = vadd.f32 %v1833, %v1965
        %v1967 = vpop.f32.mrf.mxu0
        %v1968 = vadd.f32 %v1833, %v1967
        %1969 = vmatprep.mubr.f32.mxu0 0.0
        %1970 = vmatmul.mubr.f32.gmra.mxu0 %v1861
        %v1971 = vpop.f32.mrf.mxu0
        %v1972 = vadd.f32 %v1837, %v1971
        %v1973 = vpop.f32.mrf.mxu0
        %v1974 = vadd.f32 %v1837, %v1973
        %1975 = vdwg.mxu0
        %1976 = vmatprep.subr.mxu0 0.0
        %1977 = vmatpush1.msra.mxu0 0.0
        %1978 = vmatprep.subr.mxu0 0.0
        %1979 = vmatpush1.msra.mxu0 0.0
        %1980 = vmatprep.subr.mxu0 0.0
        %1981 = vmatpush1.msra.mxu0 0.0
        %1982 = vmatprep.subr.mxu0 0.0
        %1983 = vmatpush1.msra.mxu0 0.0
        %1984 = vmatprep.subr.mxu0 0.0
        %1985 = vmatpush1.msra.mxu0 0.0
        %1986 = vmatprep.subr.mxu0 0.0
        %1987 = vmatpush1.msra.mxu0 0.0
        %1988 = vmatprep.subr.mxu0 0.0
        %1989 = vmatpush1.msra.mxu0 0.0
        %1990 = vmatprep.subr.mxu0 0.0
        %1991 = vmatpush1.msra.mxu0 0.0
        %1992 = vmatprep.subr.mxu0 %v1797
        %1993 = vmatpush1.msra.mxu0 %v1796
        %1994 = vmatprep.subr.mxu0 %v1793
        %1995 = vmatpush1.msra.mxu0 %v1792
        %1996 = vmatprep.subr.mxu0 %v1789
        %1997 = vmatpush1.msra.mxu0 %v1788
        %1998 = vmatprep.subr.mxu0 %v1785
        %1999 = vmatpush1.msra.mxu0 %v1784
        %2000 = vmatprep.subr.mxu0 %v1781
        %2001 = vmatpush1.msra.mxu0 %v1780
        %2002 = vmatprep.subr.mxu0 %v1777
        %2003 = vmatpush1.msra.mxu0 %v1776
        %2004 = vmatprep.subr.mxu0 %v1773
        %2005 = vmatpush1.msra.mxu0 %v1772
        %2006 = vmatprep.subr.mxu0 %v1769
        %2007 = vmatpush1.msra.mxu0 %v1768
        %2008 = vmatprep.subr.mxu0 0.0
        %2009 = vmatpush2.msra.mxu0 0.0
        %2010 = vmatprep.subr.mxu0 0.0
        %2011 = vmatpush2.msra.mxu0 0.0
        %2012 = vmatprep.subr.mxu0 0.0
        %2013 = vmatpush2.msra.mxu0 0.0
        %2014 = vmatprep.subr.mxu0 0.0
        %2015 = vmatpush2.msra.mxu0 0.0
        %2016 = vmatprep.subr.mxu0 0.0
        %2017 = vmatpush2.msra.mxu0 0.0
        %2018 = vmatprep.subr.mxu0 0.0
        %2019 = vmatpush2.msra.mxu0 0.0
        %2020 = vmatprep.subr.mxu0 0.0
        %2021 = vmatpush2.msra.mxu0 0.0
        %2022 = vmatprep.subr.mxu0 0.0
        %2023 = vmatpush2.msra.mxu0 0.0
        %2024 = vmatprep.subr.mxu0 0.0
        %2025 = vmatpush2.msra.mxu0 0.0
        %2026 = vmatprep.subr.mxu0 0.0
        %2027 = vmatpush2.msra.mxu0 0.0
        %2028 = vmatprep.subr.mxu0 0.0
        %2029 = vmatpush2.msra.mxu0 0.0
        %2030 = vmatprep.subr.mxu0 0.0
        %2031 = vmatpush2.msra.mxu0 0.0
        %2032 = vmatprep.subr.mxu0 0.0
        %2033 = vmatpush2.msra.mxu0 0.0
        %2034 = vmatprep.subr.mxu0 0.0
        %2035 = vmatpush2.msra.mxu0 0.0
        %2036 = vmatprep.subr.mxu0 0.0
        %2037 = vmatpush2.msra.mxu0 0.0
        %2038 = vmatprep.subr.mxu0 0.0
        %2039 = vmatpush2.msra.mxu0 0.0
        %2040 = vmatprep.mubr.f32.mxu0 0.0
        %2041 = vmatmul.mubr.f32.gmra.mxu0 %v1840
        %v2042 = vpop.f32.mrf.mxu0
        %v2043 = vadd.f32 %v1809, %v2042
        %v2044 = vpop.f32.mrf.mxu0
        %v2045 = vadd.f32 %v1809, %v2044
        %2046 = vmatprep.mubr.f32.mxu0 0.0
        %2047 = vmatmul.mubr.f32.gmra.mxu0 %v1843
        %v2048 = vpop.f32.mrf.mxu0
        %v2049 = vadd.f32 %v1813, %v2048
        %v2050 = vpop.f32.mrf.mxu0
        %v2051 = vadd.f32 %v1813, %v2050
        %2052 = vmatprep.mubr.f32.mxu0 0.0
        %2053 = vmatmul.mubr.f32.gmra.mxu0 %v1846
        %v2054 = vpop.f32.mrf.mxu0
        %v2055 = vadd.f32 %v1817, %v2054
        %v2056 = vpop.f32.mrf.mxu0
        %v2057 = vadd.f32 %v1817, %v2056
        %2058 = vmatprep.mubr.f32.mxu0 0.0
        %2059 = vmatmul.mubr.f32.gmra.mxu0 %v1849
        %v2060 = vpop.f32.mrf.mxu0
        %v2061 = vadd.f32 %v1821, %v2060
        %v2062 = vpop.f32.mrf.mxu0
        %v2063 = vadd.f32 %v1821, %v2062
        %2064 = vmatprep.mubr.f32.mxu0 0.0
        %2065 = vmatmul.mubr.f32.gmra.mxu0 %v1852
        %v2066 = vpop.f32.mrf.mxu0
        %v2067 = vadd.f32 %v1825, %v2066
        %v2068 = vpop.f32.mrf.mxu0
        %v2069 = vadd.f32 %v1825, %v2068
        %2070 = vmatprep.mubr.f32.mxu0 0.0
        %2071 = vmatmul.mubr.f32.gmra.mxu0 %v1855
        %v2072 = vpop.f32.mrf.mxu0
        %v2073 = vadd.f32 %v1829, %v2072
        %v2074 = vpop.f32.mrf.mxu0
        %v2075 = vadd.f32 %v1829, %v2074
        %2076 = vmatprep.mubr.f32.mxu0 0.0
        %2077 = vmatmul.mubr.f32.gmra.mxu0 %v1858
        %v2078 = vpop.f32.mrf.mxu0
        %v2079 = vadd.f32 %v1833, %v2078
        %v2080 = vpop.f32.mrf.mxu0
        %v2081 = vadd.f32 %v1833, %v2080
        %2082 = vmatprep.mubr.f32.mxu0 0.0
        %2083 = vmatmul.mubr.f32.gmra.mxu0 %v1861
        %v2084 = vpop.f32.mrf.mxu0
        %v2085 = vadd.f32 %v1837, %v2084
        %v2086 = vpop.f32.mrf.mxu0
        %v2087 = vadd.f32 %v1837, %v2086
        %2088 = vdwg.mxu0
        %v2089 = vtanh.pop %v1930
        %v2090 = vtanh.pop %v1932
        %v2091 = vtanh.pop %v2043
        %v2092 = vtanh.pop %v2045
        %v2093 = vtanh.pop %v1936
        %v2094 = vtanh.pop %v1938
        %v2095 = vtanh.pop %v2049
        %v2096 = vtanh.pop %v2051
        %v2097 = vtanh.pop %v1942
        %v2098 = vtanh.pop %v1944
        %v2099 = vtanh.pop %v2055
        %v2100 = vtanh.pop %v2057
        %v2101 = vtanh.pop %v1948
        %v2102 = vtanh.pop %v1950
        %v2103 = vtanh.pop %v2061
        %v2104 = vtanh.pop %v2063
        %v2105 = vtanh.pop %v1954
        %v2106 = vtanh.pop %v1956
        %v2107 = vtanh.pop %v2067
        %v2108 = vtanh.pop %v2069
        %v2109 = vtanh.pop %v1960
        %v2110 = vtanh.pop %v1962
        %v2111 = vtanh.pop %v2073
        %v2112 = vtanh.pop %v2075
        %v2113 = vtanh.pop %v1966
        %v2114 = vtanh.pop %v1968
        %v2115 = vtanh.pop %v2079
        %v2116 = vtanh.pop %v2081
        %v2117 = vtanh.pop %v1972
        %v2118 = vtanh.pop %v1974
        %v2119 = vtanh.pop %v2085
        %v2120 = vtanh.pop %v2087
        %s2121 = scalar_lea.vmem [#allocation2], 320
        %v2122 = vld [vmem:[%s2121] sm:$0xff]
        %v2123 = vld [vmem:[%s2121 + $0x8] sm:$0xff]
        %v2124 = vld [vmem:[%s2121 + $0x10] sm:$0xff]
        %v2125 = vld [vmem:[%s2121 + $0x18] sm:$0xff]
        %v2126 = vld [vmem:[%s2121 + $0x20] sm:$0xff]
        %v2127 = vld [vmem:[%s2121 + $0x28] sm:$0xff]
        %v2128 = vld [vmem:[%s2121 + $0x30] sm:$0xff]
        %v2129 = vld [vmem:[%s2121 + $0x38] sm:$0xff]
        %2130 = vset.pattern.permute.xlu0 8
        %2131 = vperm.xlu0 %2130, %v192
        %v2132 = vpop.permute.xlu0 %2131
        %2134 = vset.pattern.permute.xlu0 8
        %2135 = vperm.xlu0 %2134, %v193
        %v2136 = vpop.permute.xlu0 %2135
        %2138 = vset.pattern.permute.xlu0 8
        %2139 = vperm.xlu0 %2138, %v194
        %v2140 = vpop.permute.xlu0 %2139
        %2142 = vset.pattern.permute.xlu0 8
        %2143 = vperm.xlu0 %2142, %v195
        %v2144 = vpop.permute.xlu0 %2143
        %2146 = vset.pattern.permute.xlu0 8
        %2147 = vperm.xlu0 %2146, %v196
        %v2148 = vpop.permute.xlu0 %2147
        %2150 = vset.pattern.permute.xlu0 8
        %2151 = vperm.xlu0 %2150, %v197
        %v2152 = vpop.permute.xlu0 %2151
        %2154 = vset.pattern.permute.xlu0 8
        %2155 = vperm.xlu0 %2154, %v198
        %v2156 = vpop.permute.xlu0 %2155
        %2158 = vset.pattern.permute.xlu0 8
        %2159 = vperm.xlu0 %2158, %v199
        %v2160 = vpop.permute.xlu0 %2159
        %v2163 = vsel %vm546, %v2122, 0
        %v2166 = vsel %vm546, %v2123, 0
        %v2169 = vsel %vm546, %v2124, 0
        %v2172 = vsel %vm546, %v2125, 0
        %v2175 = vsel %vm546, %v2126, 0
        %v2178 = vsel %vm546, %v2127, 0
        %v2181 = vsel %vm546, %v2128, 0
        %v2184 = vsel %vm546, %v2129, 0
        %2186 = vmatprep.subr.mxu0 0.0
        %2187 = vmatpush1.msra.mxu0 0.0
        %2188 = vmatprep.subr.mxu0 0.0
        %2189 = vmatpush1.msra.mxu0 0.0
        %2190 = vmatprep.subr.mxu0 0.0
        %2191 = vmatpush1.msra.mxu0 0.0
        %2192 = vmatprep.subr.mxu0 0.0
        %2193 = vmatpush1.msra.mxu0 0.0
        %2194 = vmatprep.subr.mxu0 0.0
        %2195 = vmatpush1.msra.mxu0 0.0
        %2196 = vmatprep.subr.mxu0 0.0
        %2197 = vmatpush1.msra.mxu0 0.0
        %2198 = vmatprep.subr.mxu0 0.0
        %2199 = vmatpush1.msra.mxu0 0.0
        %2200 = vmatprep.subr.mxu0 0.0
        %2201 = vmatpush1.msra.mxu0 0.0
        %2202 = vmatprep.subr.mxu0 %v2118
        %2203 = vmatpush1.msra.mxu0 %v2117
        %2204 = vmatprep.subr.mxu0 %v2114
        %2205 = vmatpush1.msra.mxu0 %v2113
        %2206 = vmatprep.subr.mxu0 %v2110
        %2207 = vmatpush1.msra.mxu0 %v2109
        %2208 = vmatprep.subr.mxu0 %v2106
        %2209 = vmatpush1.msra.mxu0 %v2105
        %2210 = vmatprep.subr.mxu0 %v2102
        %2211 = vmatpush1.msra.mxu0 %v2101
        %2212 = vmatprep.subr.mxu0 %v2098
        %2213 = vmatpush1.msra.mxu0 %v2097
        %2214 = vmatprep.subr.mxu0 %v2094
        %2215 = vmatpush1.msra.mxu0 %v2093
        %2216 = vmatprep.subr.mxu0 %v2090
        %2217 = vmatpush1.msra.mxu0 %v2089
        %2218 = vmatprep.subr.mxu0 0.0
        %2219 = vmatpush2.msra.mxu0 0.0
        %2220 = vmatprep.subr.mxu0 0.0
        %2221 = vmatpush2.msra.mxu0 0.0
        %2222 = vmatprep.subr.mxu0 0.0
        %2223 = vmatpush2.msra.mxu0 0.0
        %2224 = vmatprep.subr.mxu0 0.0
        %2225 = vmatpush2.msra.mxu0 0.0
        %2226 = vmatprep.subr.mxu0 0.0
        %2227 = vmatpush2.msra.mxu0 0.0
        %2228 = vmatprep.subr.mxu0 0.0
        %2229 = vmatpush2.msra.mxu0 0.0
        %2230 = vmatprep.subr.mxu0 0.0
        %2231 = vmatpush2.msra.mxu0 0.0
        %2232 = vmatprep.subr.mxu0 0.0
        %2233 = vmatpush2.msra.mxu0 0.0
        %2234 = vmatprep.subr.mxu0 0.0
        %2235 = vmatpush2.msra.mxu0 0.0
        %2236 = vmatprep.subr.mxu0 0.0
        %2237 = vmatpush2.msra.mxu0 0.0
        %2238 = vmatprep.subr.mxu0 0.0
        %2239 = vmatpush2.msra.mxu0 0.0
        %2240 = vmatprep.subr.mxu0 0.0
        %2241 = vmatpush2.msra.mxu0 0.0
        %2242 = vmatprep.subr.mxu0 0.0
        %2243 = vmatpush2.msra.mxu0 0.0
        %2244 = vmatprep.subr.mxu0 0.0
        %2245 = vmatpush2.msra.mxu0 0.0
        %2246 = vmatprep.subr.mxu0 0.0
        %2247 = vmatpush2.msra.mxu0 0.0
        %2248 = vmatprep.subr.mxu0 0.0
        %2249 = vmatpush2.msra.mxu0 0.0
        %2250 = vmatprep.mubr.f32.mxu0 0.0
        %2251 = vmatmul.mubr.f32.gmra.mxu0 %v2163
        %v2252 = vpop.f32.mrf.mxu0
        %v2253 = vadd.f32 %v2132, %v2252
        %v2254 = vpop.f32.mrf.mxu0
        %v2255 = vadd.f32 %v2132, %v2254
        %2256 = vmatprep.mubr.f32.mxu0 0.0
        %2257 = vmatmul.mubr.f32.gmra.mxu0 %v2166
        %v2258 = vpop.f32.mrf.mxu0
        %v2259 = vadd.f32 %v2136, %v2258
        %v2260 = vpop.f32.mrf.mxu0
        %v2261 = vadd.f32 %v2136, %v2260
        %2262 = vmatprep.mubr.f32.mxu0 0.0
        %2263 = vmatmul.mubr.f32.gmra.mxu0 %v2169
        %v2264 = vpop.f32.mrf.mxu0
        %v2265 = vadd.f32 %v2140, %v2264
        %v2266 = vpop.f32.mrf.mxu0
        %v2267 = vadd.f32 %v2140, %v2266
        %2268 = vmatprep.mubr.f32.mxu0 0.0
        %2269 = vmatmul.mubr.f32.gmra.mxu0 %v2172
        %v2270 = vpop.f32.mrf.mxu0
        %v2271 = vadd.f32 %v2144, %v2270
        %v2272 = vpop.f32.mrf.mxu0
        %v2273 = vadd.f32 %v2144, %v2272
        %2274 = vmatprep.mubr.f32.mxu0 0.0
        %2275 = vmatmul.mubr.f32.gmra.mxu0 %v2175
        %v2276 = vpop.f32.mrf.mxu0
        %v2277 = vadd.f32 %v2148, %v2276
        %v2278 = vpop.f32.mrf.mxu0
        %v2279 = vadd.f32 %v2148, %v2278
        %2280 = vmatprep.mubr.f32.mxu0 0.0
        %2281 = vmatmul.mubr.f32.gmra.mxu0 %v2178
        %v2282 = vpop.f32.mrf.mxu0
        %v2283 = vadd.f32 %v2152, %v2282
        %v2284 = vpop.f32.mrf.mxu0
        %v2285 = vadd.f32 %v2152, %v2284
        %2286 = vmatprep.mubr.f32.mxu0 0.0
        %2287 = vmatmul.mubr.f32.gmra.mxu0 %v2181
        %v2288 = vpop.f32.mrf.mxu0
        %v2289 = vadd.f32 %v2156, %v2288
        %v2290 = vpop.f32.mrf.mxu0
        %v2291 = vadd.f32 %v2156, %v2290
        %2292 = vmatprep.mubr.f32.mxu0 0.0
        %2293 = vmatmul.mubr.f32.gmra.mxu0 %v2184
        %v2294 = vpop.f32.mrf.mxu0
        %v2295 = vadd.f32 %v2160, %v2294
        %v2296 = vpop.f32.mrf.mxu0
        %v2297 = vadd.f32 %v2160, %v2296
        %2298 = vdwg.mxu0
        %2299 = vmatprep.subr.mxu0 0.0
        %2300 = vmatpush1.msra.mxu0 0.0
        %2301 = vmatprep.subr.mxu0 0.0
        %2302 = vmatpush1.msra.mxu0 0.0
        %2303 = vmatprep.subr.mxu0 0.0
        %2304 = vmatpush1.msra.mxu0 0.0
        %2305 = vmatprep.subr.mxu0 0.0
        %2306 = vmatpush1.msra.mxu0 0.0
        %2307 = vmatprep.subr.mxu0 0.0
        %2308 = vmatpush1.msra.mxu0 0.0
        %2309 = vmatprep.subr.mxu0 0.0
        %2310 = vmatpush1.msra.mxu0 0.0
        %2311 = vmatprep.subr.mxu0 0.0
        %2312 = vmatpush1.msra.mxu0 0.0
        %2313 = vmatprep.subr.mxu0 0.0
        %2314 = vmatpush1.msra.mxu0 0.0
        %2315 = vmatprep.subr.mxu0 %v2120
        %2316 = vmatpush1.msra.mxu0 %v2119
        %2317 = vmatprep.subr.mxu0 %v2116
        %2318 = vmatpush1.msra.mxu0 %v2115
        %2319 = vmatprep.subr.mxu0 %v2112
        %2320 = vmatpush1.msra.mxu0 %v2111
        %2321 = vmatprep.subr.mxu0 %v2108
        %2322 = vmatpush1.msra.mxu0 %v2107
        %2323 = vmatprep.subr.mxu0 %v2104
        %2324 = vmatpush1.msra.mxu0 %v2103
        %2325 = vmatprep.subr.mxu0 %v2100
        %2326 = vmatpush1.msra.mxu0 %v2099
        %2327 = vmatprep.subr.mxu0 %v2096
        %2328 = vmatpush1.msra.mxu0 %v2095
        %2329 = vmatprep.subr.mxu0 %v2092
        %2330 = vmatpush1.msra.mxu0 %v2091
        %2331 = vmatprep.subr.mxu0 0.0
        %2332 = vmatpush2.msra.mxu0 0.0
        %2333 = vmatprep.subr.mxu0 0.0
        %2334 = vmatpush2.msra.mxu0 0.0
        %2335 = vmatprep.subr.mxu0 0.0
        %2336 = vmatpush2.msra.mxu0 0.0
        %2337 = vmatprep.subr.mxu0 0.0
        %2338 = vmatpush2.msra.mxu0 0.0
        %2339 = vmatprep.subr.mxu0 0.0
        %2340 = vmatpush2.msra.mxu0 0.0
        %2341 = vmatprep.subr.mxu0 0.0
        %2342 = vmatpush2.msra.mxu0 0.0
        %2343 = vmatprep.subr.mxu0 0.0
        %2344 = vmatpush2.msra.mxu0 0.0
        %2345 = vmatprep.subr.mxu0 0.0
        %2346 = vmatpush2.msra.mxu0 0.0
        %2347 = vmatprep.subr.mxu0 0.0
        %2348 = vmatpush2.msra.mxu0 0.0
        %2349 = vmatprep.subr.mxu0 0.0
        %2350 = vmatpush2.msra.mxu0 0.0
        %2351 = vmatprep.subr.mxu0 0.0
        %2352 = vmatpush2.msra.mxu0 0.0
        %2353 = vmatprep.subr.mxu0 0.0
        %2354 = vmatpush2.msra.mxu0 0.0
        %2355 = vmatprep.subr.mxu0 0.0
        %2356 = vmatpush2.msra.mxu0 0.0
        %2357 = vmatprep.subr.mxu0 0.0
        %2358 = vmatpush2.msra.mxu0 0.0
        %2359 = vmatprep.subr.mxu0 0.0
        %2360 = vmatpush2.msra.mxu0 0.0
        %2361 = vmatprep.subr.mxu0 0.0
        %2362 = vmatpush2.msra.mxu0 0.0
        %2363 = vmatprep.mubr.f32.mxu0 0.0
        %2364 = vmatmul.mubr.f32.gmra.mxu0 %v2163
        %v2365 = vpop.f32.mrf.mxu0
        %v2366 = vadd.f32 %v2132, %v2365
        %v2367 = vpop.f32.mrf.mxu0
        %v2368 = vadd.f32 %v2132, %v2367
        %2369 = vmatprep.mubr.f32.mxu0 0.0
        %2370 = vmatmul.mubr.f32.gmra.mxu0 %v2166
        %v2371 = vpop.f32.mrf.mxu0
        %v2372 = vadd.f32 %v2136, %v2371
        %v2373 = vpop.f32.mrf.mxu0
        %v2374 = vadd.f32 %v2136, %v2373
        %2375 = vmatprep.mubr.f32.mxu0 0.0
        %2376 = vmatmul.mubr.f32.gmra.mxu0 %v2169
        %v2377 = vpop.f32.mrf.mxu0
        %v2378 = vadd.f32 %v2140, %v2377
        %v2379 = vpop.f32.mrf.mxu0
        %v2380 = vadd.f32 %v2140, %v2379
        %2381 = vmatprep.mubr.f32.mxu0 0.0
        %2382 = vmatmul.mubr.f32.gmra.mxu0 %v2172
        %v2383 = vpop.f32.mrf.mxu0
        %v2384 = vadd.f32 %v2144, %v2383
        %v2385 = vpop.f32.mrf.mxu0
        %v2386 = vadd.f32 %v2144, %v2385
        %2387 = vmatprep.mubr.f32.mxu0 0.0
        %2388 = vmatmul.mubr.f32.gmra.mxu0 %v2175
        %v2389 = vpop.f32.mrf.mxu0
        %v2390 = vadd.f32 %v2148, %v2389
        %v2391 = vpop.f32.mrf.mxu0
        %v2392 = vadd.f32 %v2148, %v2391
        %2393 = vmatprep.mubr.f32.mxu0 0.0
        %2394 = vmatmul.mubr.f32.gmra.mxu0 %v2178
        %v2395 = vpop.f32.mrf.mxu0
        %v2396 = vadd.f32 %v2152, %v2395
        %v2397 = vpop.f32.mrf.mxu0
        %v2398 = vadd.f32 %v2152, %v2397
        %2399 = vmatprep.mubr.f32.mxu0 0.0
        %2400 = vmatmul.mubr.f32.gmra.mxu0 %v2181
        %v2401 = vpop.f32.mrf.mxu0
        %v2402 = vadd.f32 %v2156, %v2401
        %v2403 = vpop.f32.mrf.mxu0
        %v2404 = vadd.f32 %v2156, %v2403
        %2405 = vmatprep.mubr.f32.mxu0 0.0
        %2406 = vmatmul.mubr.f32.gmra.mxu0 %v2184
        %v2407 = vpop.f32.mrf.mxu0
        %v2408 = vadd.f32 %v2160, %v2407
        %v2409 = vpop.f32.mrf.mxu0
        %v2410 = vadd.f32 %v2160, %v2409
        %2411 = vdwg.mxu0
        %s2412 = scalar_lea.vmem [#allocation2], 384
        %v2413 = vld [vmem:[%s2412] sm:$0xff]
        %v2414 = vld [vmem:[%s2412 + $0x8] sm:$0xff]
        %v2415 = vld [vmem:[%s2412 + $0x10] sm:$0xff]
        %v2416 = vld [vmem:[%s2412 + $0x18] sm:$0xff]
        %v2417 = vld [vmem:[%s2412 + $0x20] sm:$0xff]
        %v2418 = vld [vmem:[%s2412 + $0x28] sm:$0xff]
        %v2419 = vld [vmem:[%s2412 + $0x30] sm:$0xff]
        %v2420 = vld [vmem:[%s2412 + $0x38] sm:$0xff]
        %2421 = vset.pattern.permute.xlu0 9
        %2422 = vperm.xlu0 %2421, %v192
        %v2423 = vpop.permute.xlu0 %2422
        %2425 = vset.pattern.permute.xlu0 9
        %2426 = vperm.xlu0 %2425, %v193
        %v2427 = vpop.permute.xlu0 %2426
        %2428 = vset.pattern.permute.xlu0 9
        %2429 = vperm.xlu0 %2428, %v194
        %v2430 = vpop.permute.xlu0 %2429
        %2431 = vset.pattern.permute.xlu0 9
        %2432 = vperm.xlu0 %2431, %v195
        %v2433 = vpop.permute.xlu0 %2432
        %2434 = vset.pattern.permute.xlu0 9
        %2435 = vperm.xlu0 %2434, %v196
        %v2436 = vpop.permute.xlu0 %2435
        %2437 = vset.pattern.permute.xlu0 9
        %2438 = vperm.xlu0 %2437, %v197
        %v2439 = vpop.permute.xlu0 %2438
        %2440 = vset.pattern.permute.xlu0 9
        %2441 = vperm.xlu0 %2440, %v198
        %v2442 = vpop.permute.xlu0 %2441
        %2443 = vset.pattern.permute.xlu0 9
        %2444 = vperm.xlu0 %2443, %v199
        %v2445 = vpop.permute.xlu0 %2444
        %v2447 = vsel %vm546, %v2413, 0
        %v2450 = vsel %vm546, %v2414, 0
        %v2453 = vsel %vm546, %v2415, 0
        %v2456 = vsel %vm546, %v2416, 0
        %v2459 = vsel %vm546, %v2417, 0
        %v2462 = vsel %vm546, %v2418, 0
        %v2465 = vsel %vm546, %v2419, 0
        %v2468 = vsel %vm546, %v2420, 0
        %2470 = vmatprep.subr.mxu0 0.0
        %2471 = vmatpush1.msra.mxu0 0.0
        %2472 = vmatprep.subr.mxu0 0.0
        %2473 = vmatpush1.msra.mxu0 0.0
        %2474 = vmatprep.subr.mxu0 0.0
        %2475 = vmatpush1.msra.mxu0 0.0
        %2476 = vmatprep.subr.mxu0 0.0
        %2477 = vmatpush1.msra.mxu0 0.0
        %2478 = vmatprep.subr.mxu0 0.0
        %2479 = vmatpush1.msra.mxu0 0.0
        %2480 = vmatprep.subr.mxu0 0.0
        %2481 = vmatpush1.msra.mxu0 0.0
        %2482 = vmatprep.subr.mxu0 0.0
        %2483 = vmatpush1.msra.mxu0 0.0
        %2484 = vmatprep.subr.mxu0 0.0
        %2485 = vmatpush1.msra.mxu0 0.0
        %2486 = vmatprep.subr.mxu0 %v2297
        %2487 = vmatpush1.msra.mxu0 %v2295
        %2488 = vmatprep.subr.mxu0 %v2291
        %2489 = vmatpush1.msra.mxu0 %v2289
        %2490 = vmatprep.subr.mxu0 %v2285
        %2491 = vmatpush1.msra.mxu0 %v2283
        %2492 = vmatprep.subr.mxu0 %v2279
        %2493 = vmatpush1.msra.mxu0 %v2277
        %2494 = vmatprep.subr.mxu0 %v2273
        %2495 = vmatpush1.msra.mxu0 %v2271
        %2496 = vmatprep.subr.mxu0 %v2267
        %2497 = vmatpush1.msra.mxu0 %v2265
        %2498 = vmatprep.subr.mxu0 %v2261
        %2499 = vmatpush1.msra.mxu0 %v2259
        %2500 = vmatprep.subr.mxu0 %v2255
        %2501 = vmatpush1.msra.mxu0 %v2253
        %2502 = vmatprep.subr.mxu0 0.0
        %2503 = vmatpush2.msra.mxu0 0.0
        %2504 = vmatprep.subr.mxu0 0.0
        %2505 = vmatpush2.msra.mxu0 0.0
        %2506 = vmatprep.subr.mxu0 0.0
        %2507 = vmatpush2.msra.mxu0 0.0
        %2508 = vmatprep.subr.mxu0 0.0
        %2509 = vmatpush2.msra.mxu0 0.0
        %2510 = vmatprep.subr.mxu0 0.0
        %2511 = vmatpush2.msra.mxu0 0.0
        %2512 = vmatprep.subr.mxu0 0.0
        %2513 = vmatpush2.msra.mxu0 0.0
        %2514 = vmatprep.subr.mxu0 0.0
        %2515 = vmatpush2.msra.mxu0 0.0
        %2516 = vmatprep.subr.mxu0 0.0
        %2517 = vmatpush2.msra.mxu0 0.0
        %2518 = vmatprep.subr.mxu0 0.0
        %2519 = vmatpush2.msra.mxu0 0.0
        %2520 = vmatprep.subr.mxu0 0.0
        %2521 = vmatpush2.msra.mxu0 0.0
        %2522 = vmatprep.subr.mxu0 0.0
        %2523 = vmatpush2.msra.mxu0 0.0
        %2524 = vmatprep.subr.mxu0 0.0
        %2525 = vmatpush2.msra.mxu0 0.0
        %2526 = vmatprep.subr.mxu0 0.0
        %2527 = vmatpush2.msra.mxu0 0.0
        %2528 = vmatprep.subr.mxu0 0.0
        %2529 = vmatpush2.msra.mxu0 0.0
        %2530 = vmatprep.subr.mxu0 0.0
        %2531 = vmatpush2.msra.mxu0 0.0
        %2532 = vmatprep.subr.mxu0 0.0
        %2533 = vmatpush2.msra.mxu0 0.0
        %2534 = vmatprep.mubr.f32.mxu0 0.0
        %2535 = vmatmul.mubr.f32.gmra.mxu0 %v2447
        %v2536 = vpop.f32.mrf.mxu0
        %v2537 = vadd.f32 %v2423, %v2536
        %v2538 = vpop.f32.mrf.mxu0
        %v2539 = vadd.f32 %v2423, %v2538
        %2540 = vmatprep.mubr.f32.mxu0 0.0
        %2541 = vmatmul.mubr.f32.gmra.mxu0 %v2450
        %v2542 = vpop.f32.mrf.mxu0
        %v2543 = vpop.f32.mrf.mxu0
        %2544 = vmatprep.mubr.f32.mxu0 0.0
        %2545 = vmatmul.mubr.f32.gmra.mxu0 %v2453
        %v2546 = vpop.f32.mrf.mxu0
        %v2547 = vpop.f32.mrf.mxu0
        %2548 = vmatprep.mubr.f32.mxu0 0.0
        %2549 = vmatmul.mubr.f32.gmra.mxu0 %v2456
        %v2550 = vpop.f32.mrf.mxu0
        %v2551 = vpop.f32.mrf.mxu0
        %2552 = vmatprep.mubr.f32.mxu0 0.0
        %2553 = vmatmul.mubr.f32.gmra.mxu0 %v2459
        %v2554 = vpop.f32.mrf.mxu0
        %v2555 = vpop.f32.mrf.mxu0
        %2556 = vmatprep.mubr.f32.mxu0 0.0
        %2557 = vmatmul.mubr.f32.gmra.mxu0 %v2462
        %v2558 = vpop.f32.mrf.mxu0
        %v2559 = vpop.f32.mrf.mxu0
        %2560 = vmatprep.mubr.f32.mxu0 0.0
        %2561 = vmatmul.mubr.f32.gmra.mxu0 %v2465
        %v2562 = vpop.f32.mrf.mxu0
        %v2563 = vpop.f32.mrf.mxu0
        %2564 = vmatprep.mubr.f32.mxu0 0.0
        %2565 = vmatmul.mubr.f32.gmra.mxu0 %v2468
        %v2566 = vpop.f32.mrf.mxu0
        %v2567 = vpop.f32.mrf.mxu0
        %2568 = vdwg.mxu0
        %2569 = vmatprep.subr.mxu0 0.0
        %2570 = vmatpush1.msra.mxu0 0.0
        %2571 = vmatprep.subr.mxu0 0.0
        %2572 = vmatpush1.msra.mxu0 0.0
        %2573 = vmatprep.subr.mxu0 0.0
        %2574 = vmatpush1.msra.mxu0 0.0
        %2575 = vmatprep.subr.mxu0 0.0
        %2576 = vmatpush1.msra.mxu0 0.0
        %2577 = vmatprep.subr.mxu0 0.0
        %2578 = vmatpush1.msra.mxu0 0.0
        %2579 = vmatprep.subr.mxu0 0.0
        %2580 = vmatpush1.msra.mxu0 0.0
        %2581 = vmatprep.subr.mxu0 0.0
        %2582 = vmatpush1.msra.mxu0 0.0
        %2583 = vmatprep.subr.mxu0 0.0
        %2584 = vmatpush1.msra.mxu0 0.0
        %2585 = vmatprep.subr.mxu0 %v2410
        %2586 = vmatpush1.msra.mxu0 %v2408
        %2587 = vmatprep.subr.mxu0 %v2404
        %2588 = vmatpush1.msra.mxu0 %v2402
        %2589 = vmatprep.subr.mxu0 %v2398
        %2590 = vmatpush1.msra.mxu0 %v2396
        %2591 = vmatprep.subr.mxu0 %v2392
        %2592 = vmatpush1.msra.mxu0 %v2390
        %2593 = vmatprep.subr.mxu0 %v2386
        %2594 = vmatpush1.msra.mxu0 %v2384
        %2595 = vmatprep.subr.mxu0 %v2380
        %2596 = vmatpush1.msra.mxu0 %v2378
        %2597 = vmatprep.subr.mxu0 %v2374
        %2598 = vmatpush1.msra.mxu0 %v2372
        %2599 = vmatprep.subr.mxu0 %v2368
        %2600 = vmatpush1.msra.mxu0 %v2366
        %2601 = vmatprep.subr.mxu0 0.0
        %2602 = vmatpush2.msra.mxu0 0.0
        %2603 = vmatprep.subr.mxu0 0.0
        %2604 = vmatpush2.msra.mxu0 0.0
        %2605 = vmatprep.subr.mxu0 0.0
        %2606 = vmatpush2.msra.mxu0 0.0
        %2607 = vmatprep.subr.mxu0 0.0
        %2608 = vmatpush2.msra.mxu0 0.0
        %2609 = vmatprep.subr.mxu0 0.0
        %2610 = vmatpush2.msra.mxu0 0.0
        %2611 = vmatprep.subr.mxu0 0.0
        %2612 = vmatpush2.msra.mxu0 0.0
        %2613 = vmatprep.subr.mxu0 0.0
        %2614 = vmatpush2.msra.mxu0 0.0
        %2615 = vmatprep.subr.mxu0 0.0
        %2616 = vmatpush2.msra.mxu0 0.0
        %2617 = vmatprep.subr.mxu0 0.0
        %2618 = vmatpush2.msra.mxu0 0.0
        %2619 = vmatprep.subr.mxu0 0.0
        %2620 = vmatpush2.msra.mxu0 0.0
        %2621 = vmatprep.subr.mxu0 0.0
        %2622 = vmatpush2.msra.mxu0 0.0
        %2623 = vmatprep.subr.mxu0 0.0
        %2624 = vmatpush2.msra.mxu0 0.0
        %2625 = vmatprep.subr.mxu0 0.0
        %2626 = vmatpush2.msra.mxu0 0.0
        %2627 = vmatprep.subr.mxu0 0.0
        %2628 = vmatpush2.msra.mxu0 0.0
        %2629 = vmatprep.subr.mxu0 0.0
        %2630 = vmatpush2.msra.mxu0 0.0
        %2631 = vmatprep.subr.mxu0 0.0
        %2632 = vmatpush2.msra.mxu0 0.0
        %2633 = vmatprep.mubr.f32.mxu0 0.0
        %2634 = vmatmul.mubr.f32.gmra.mxu0 %v2447
        %v2635 = vpop.f32.mrf.mxu0
        %v2636 = vadd.f32 %v2423, %v2635
        %v2637 = vpop.f32.mrf.mxu0
        %v2638 = vadd.f32 %v2423, %v2637
        %2639 = vmatprep.mubr.f32.mxu0 0.0
        %2640 = vmatmul.mubr.f32.gmra.mxu0 %v2450
        %v2641 = vpop.f32.mrf.mxu0
        %v2642 = vpop.f32.mrf.mxu0
        %2643 = vmatprep.mubr.f32.mxu0 0.0
        %2644 = vmatmul.mubr.f32.gmra.mxu0 %v2453
        %v2645 = vpop.f32.mrf.mxu0
        %v2646 = vpop.f32.mrf.mxu0
        %2647 = vmatprep.mubr.f32.mxu0 0.0
        %2648 = vmatmul.mubr.f32.gmra.mxu0 %v2456
        %v2649 = vpop.f32.mrf.mxu0
        %v2650 = vpop.f32.mrf.mxu0
        %2651 = vmatprep.mubr.f32.mxu0 0.0
        %2652 = vmatmul.mubr.f32.gmra.mxu0 %v2459
        %v2653 = vpop.f32.mrf.mxu0
        %v2654 = vpop.f32.mrf.mxu0
        %2655 = vmatprep.mubr.f32.mxu0 0.0
        %2656 = vmatmul.mubr.f32.gmra.mxu0 %v2462
        %v2657 = vpop.f32.mrf.mxu0
        %v2658 = vpop.f32.mrf.mxu0
        %2659 = vmatprep.mubr.f32.mxu0 0.0
        %2660 = vmatmul.mubr.f32.gmra.mxu0 %v2465
        %v2661 = vpop.f32.mrf.mxu0
        %v2662 = vpop.f32.mrf.mxu0
        %2663 = vmatprep.mubr.f32.mxu0 0.0
        %2664 = vmatmul.mubr.f32.gmra.mxu0 %v2468
        %v2665 = vpop.f32.mrf.mxu0
        %v2666 = vpop.f32.mrf.mxu0
        %2667 = vdwg.mxu0
        %v2668 = vsub.f32 1.0, %v189
        %v2669 = vmul.f32 %v189, %v2668
        %v2670 = vmul.f32 %v189, 0.01
        %v2675 = vcombine.low %v2537, %v2539
        %v2676 = vcombine.low %v2636, %v2638
        %v2678 = vunpack.c.l.s4 1966171168
        %v2679 = vunpack.c.0.s8 %v2678
        %v2680 = vlaneseq
        %v2681 = vshrl.u32 %v2680, 7
        %v2682 = vsub.s32 %v2679, %v2681
        %v2683 = vrot.slane %v2675, %v2682
        %v2685 = vunpack.c.l.s4 1966171168
        %v2686 = vunpack.c.0.s8 %v2685
        %v2687 = vlaneseq
        %v2688 = vshrl.u32 %v2687, 7
        %v2689 = vsub.s32 %v2686, %v2688
        %v2690 = vrot.slane %v2676, %v2689
        %v2691 = vcombine.low %v2683, %v2690
        %v2693 = vunpack.c.l.s4 1966171168
        %v2694 = vunpack.c.0.s8 %v2693
        %v2695 = vlaneseq
        %v2696 = vshrl.u32 %v2695, 7
        %v2697 = vsub.s32 %v2694, %v2696
        %v2698 = vrot.slane %v2691, %v2697
        %v2700 = vmul.f32 %v2669, %v2698
        %v2701 = vadd.f32 %v2670, %v2700
        %v2702 = vlaneseq
        %vm2703 = vcmp.ge.s32.totalorder %v2702, 0
        %vm2704 = vcmp.lt.s32.totalorder %v2702, 512
        %vm2705 = vmand %vm2703, %vm2704
        %2706 = vst.msk [vmem:[%s187] ss:$2 sm:$0xf] %vm2705, %v2701
        %v2707 = vcombine.high %v2683, %v2690
        %v2709 = vunpack.c.l.s4 1966171168
        %v2710 = vunpack.c.0.s8 %v2709
        %v2711 = vlaneseq
        %v2712 = vshrl.u32 %v2711, 7
        %v2713 = vsub.s32 %v2710, %v2712
        %v2714 = vrot.slane %v2707, %v2713
        %v2716 = vmul.f32 %v191, %v2714
        %s2717 = scalar_lea.vmem %s187, 1
        %2718 = vst.msk [vmem:[%s2717] ss:$2 sm:$0xf] %vm2705, %v2716
        %s2719 = smul.u32 4, %s15
        %p2720 = scmp.lt.s32.totalorder %s2719, 7
        %s2721 = scalar_select %p2720, %s2719, 7
        %s2722 = smul.addr %s2721, 2
        %s2723 = scalar_lea.vmem %s3, %s2722
        // Predicated region
        $region37: #{elasticity_net.1} parent=31 // pred_check
          %p2724 = pneg %p101
        $region38: #{elasticity_net.1} parent=31 // pred_check_branch
          %2726 = sbr.rel (%p2724) target = $region40
        $region39: #{elasticity_net.1} parent=31 // pred_region
          %s2727 = smul.u32 4, %s15
        $region40: #{elasticity_net.1} parent=31 // pred_fallthru
          _
      $region32: #{elasticity_net.1} parent=5 // pred_fallthru
        _
      %p2728 = scmp.le.s32.totalorder 2, %s10
      // Predicated region
      $region41: #{elasticity_net.1} parent=5 // pred_check
        %p2729 = pneg %p2728
      $region42: #{elasticity_net.1} parent=5 // pred_check_branch
        %2731 = sbr.rel (%p2729) target = $region44
      $region43: #{elasticity_net.1} parent=5 // pred_region
        %s2732 = ssub.s32 %s10, 2
        // Predicated region
        $region45: #{elasticity_net.1} parent=43 // pred_check
          %p2733 = pneg %p107
        $region46: #{elasticity_net.1} parent=43 // pred_check_branch
          %2735 = sbr.rel (%p2733) target = $region48
        $region47: #{elasticity_net.1} parent=43 // pred_region
          %s2736 = smul.u32 4, %s16
          %p2737 = scmp.lt.s32.totalorder %s2736, 7
          %s2738 = scalar_select %p2737, %s2736, 7
          %s2739 = smul.addr %s2738, 2
          %s2740 = scalar_lea.vmem %s3, %s2739
        $region48: #{elasticity_net.1} parent=43 // pred_fallthru
          _
      $region44: #{elasticity_net.1} parent=5 // pred_fallthru
        _
    $region6: #{elasticity_net.1} parent=1 // loop_footer
      %s14 = sadd.s32 1, %s10
    $region7: #{elasticity_net.1} parent=1 // loop_footer_branch
      %9 = sbr.rel target = $region3
    $region8: #{elasticity_net.1} parent=1 // loop_exit
      _
    %2741 = vsyncpa [#allocation3], 1
    %s2742 = scalar_lea.sflag [#allocation3], 1
    %2743 = vsyncpa %s2742, 1

</llo_original>
